<compile_context>
chip_gen: v6e
topology: v6e:2x2x1
jax: 0.10.0
libtpu: 0.0.40
codegen_flags: <defaults>
</compile_context>

<pallas_src>
import functools

import jax
import jax.numpy as jnp
from jax.experimental import pallas as pl
from jax.experimental.pallas import tpu as pltpu


def _round_up(x, m):
    return (x + m - 1) // m * m


def fused_gcn_kernel(a_ref, h0_ref, w_ref, b_ref, o_ref, *, n_layers):
    """Single-invocation fused GCN stack (layers statically unrolled).

    a_ref  : (N_pad, N_pad) bf16            normalized adjacency (VMEM-resident)
    h0_ref : (N_pad, F_pad) f32             input node features  (VMEM-resident)
    w_ref  : (n_layers, F_pad, F_pad) bf16  stacked layer weights
    b_ref  : (n_layers, 1, F_pad) f32       stacked layer biases
    o_ref  : (N_pad, F_pad) f32             final-layer output (written once)
    """
    a = a_ref[...]                              # (N_pad, N_pad) bf16
    h = h0_ref[...]                             # (N_pad, F_pad) f32

    for l in range(n_layers):                   # static unroll (n_layers known)
        # Feature transform on the MXU: bf16 operands, f32 accumulation.
        hw = jnp.dot(h.astype(jnp.bfloat16), w_ref[l],
                     preferred_element_type=jnp.float32)
        # Neighborhood aggregation: A_hat @ (H W), bf16 operands, f32 acc.
        agg = jnp.dot(a, hw.astype(jnp.bfloat16),
                      preferred_element_type=jnp.float32)
        h = agg + b_ref[l]                      # f32 bias add
        if l < n_layers - 1:
            h = jnp.tanh(h)                     # hidden layers: tanh (f32, EUP)

    o_ref[...] = h.astype(o_ref.dtype)          # last layer: linear


def gcn_forward(a_hat, in_feat, weights, biases):
    """Fused 5-layer GCN forward.  Returns (N, out_feats) float32."""
    n = a_hat.shape[0]
    n_layers = len(weights)
    f_dims = [in_feat.shape[1]] + [w.shape[1] for w in weights]
    f_out = f_dims[-1]

    n_pad = _round_up(max(n, 1), 128)
    f_pad = _round_up(max(f_dims), 128)

    # Zero-pad to lane-dense shapes; MXU operands in bf16.
    a_p = jnp.zeros((n_pad, n_pad), jnp.bfloat16)
    a_p = a_p.at[:n, :n].set(a_hat.astype(jnp.bfloat16))
    h0_p = jnp.zeros((n_pad, f_pad), jnp.float32)
    h0_p = h0_p.at[:n, :in_feat.shape[1]].set(in_feat.astype(jnp.float32))
    w_p = jnp.zeros((n_layers, f_pad, f_pad), jnp.bfloat16)
    b_p = jnp.zeros((n_layers, 1, f_pad), jnp.float32)
    for i, (w, b) in enumerate(zip(weights, biases)):
        w_p = w_p.at[i, :w.shape[0], :w.shape[1]].set(w.astype(jnp.bfloat16))
        b_p = b_p.at[i, 0, :b.shape[0]].set(b.astype(jnp.float32))

    # Advisory cost estimate for XLA's scheduler.
    flops = n_layers * (2 * n_pad * f_pad * f_pad + 2 * n_pad * n_pad * f_pad)
    transcendentals = (n_layers - 1) * n_pad * f_pad
    bytes_accessed = (a_p.size * 2 + h0_p.size * 4 + w_p.size * 2
                      + b_p.size * 4 + n_pad * f_pad * 4)

    # VMEM footprint (assume worst-case double-buffered inputs + output), x2 slack.
    footprint = 2 * (a_p.size * 2 + h0_p.size * 4 + w_p.size * 2
                     + b_p.size * 4 + n_pad * f_pad * 4)
    vmem_limit = int(min(64 * 2 ** 20, max(16 * 2 ** 20, 2 * footprint)))

    kernel = functools.partial(fused_gcn_kernel, n_layers=n_layers)

    out_p = pl.pallas_call(
        kernel,
        out_shape=jax.ShapeDtypeStruct((n_pad, f_pad), jnp.float32),
        grid=(1,),
        in_specs=[
            pl.BlockSpec((n_pad, n_pad), lambda i: (0, 0)),              # A_hat
            pl.BlockSpec((n_pad, f_pad), lambda i: (0, 0)),              # H0
            pl.BlockSpec((n_layers, f_pad, f_pad), lambda i: (0, 0, 0)),  # W stack
            pl.BlockSpec((n_layers, 1, f_pad), lambda i: (0, 0, 0)),      # b stack
        ],
        out_specs=pl.BlockSpec((n_pad, f_pad), lambda i: (0, 0)),
        compiler_params=pltpu.CompilerParams(
            dimension_semantics=("arbitrary",),
            vmem_limit_bytes=vmem_limit,
        ),
        cost_estimate=pl.CostEstimate(
            flops=flops,
            transcendentals=transcendentals,
            bytes_accessed=bytes_accessed,
        ),
    )(a_p, h0_p, w_p, b_p)

    return out_p[:n, :f_out]


def build_normalized_adjacency(src, dst, nnode):
    """Dense A_hat = D_in^{-1/2} A D_out^{-1/2}, A[dst, src] = 1 (clamped degs)."""
    a = jnp.zeros((nnode, nnode), dtype=jnp.float32)
    a = a.at[dst, src].add(1.0)
    out_deg = jnp.clip(a.sum(axis=0), 1.0, None)   # out-degree of src nodes
    in_deg = jnp.clip(a.sum(axis=1), 1.0, None)    # in-degree of dst nodes
    return (in_deg ** -0.5)[:, None] * a * (out_deg ** -0.5)[None, :]


def init_params(key, dims):
    """Deterministic glorot-ish init for per-layer (W, b)."""
    weights, biases = [], []
    for f_in, f_out in zip(dims[:-1], dims[1:]):
        key, kw, kb = jax.random.split(key, 3)
        scale = (6.0 / (f_in + f_out)) ** 0.5
        weights.append(jax.random.uniform(kw, (f_in, f_out), jnp.float32,
                                          -scale, scale))
        biases.append(jax.random.uniform(kb, (f_out,), jnp.float32, -0.1, 0.1))
    return weights, biases


def gcn_forward_ref(a_hat, in_feat, weights, biases, *, match_bf16):
    """Plain-JAX reference; match_bf16=True mimics the kernel's operand casts."""
    a = a_hat.astype(jnp.bfloat16) if match_bf16 else a_hat
    h = in_feat.astype(jnp.float32)
    n_layers = len(weights)
    for i, (w, b) in enumerate(zip(weights, biases)):
        if match_bf16:
            hw = jnp.dot(h.astype(jnp.bfloat16), w.astype(jnp.bfloat16),
                         preferred_element_type=jnp.float32)
            agg = jnp.dot(a, hw.astype(jnp.bfloat16),
                          preferred_element_type=jnp.float32)
        else:
            hw = h @ w
            agg = a @ hw
        h = agg + b
        if i < n_layers - 1:
            h = jnp.tanh(h)
    return h


if __name__ == "__main__":
    key = jax.random.PRNGKey(0)

    # Small synthetic graph: 16 nodes, ring + a few deterministic chords.
    nnode = 16
    src_list = list(range(nnode)) + [0, 3, 5, 7, 11, 2]
    dst_list = [(i + 1) % nnode for i in range(nnode)] + [8, 12, 1, 14, 4, 9]
    src = jnp.array(src_list, dtype=jnp.int32)
    dst = jnp.array(dst_list, dtype=jnp.int32)
    a_hat = build_normalized_adjacency(src, dst, nnode)

    # Module hyper-params: in_feats=8, h_feats=[32, 32, 32, 32], out=4.
    in_feats, h_feats, out_feats = 8, [32, 32, 32, 32], 4
    dims = [in_feats] + h_feats + [out_feats]

    key, kp, kx = jax.random.split(key, 3)
    weights, biases = init_params(kp, dims)
    in_feat = jax.random.normal(kx, (nnode, in_feats), jnp.float32)

    out = gcn_forward(a_hat, in_feat, weights, biases)
    out = jax.block_until_ready(out)
    assert out.shape == (nnode, out_feats)

    # Precision-matched reference (same bf16 operand casts, f32 accumulation).
    ref_bf16 = gcn_forward_ref(a_hat, in_feat, weights, biases, match_bf16=True)
    assert jnp.allclose(out, ref_bf16, atol=2e-3, rtol=2e-3), float(
        jnp.max(jnp.abs(out - ref_bf16)))

    # Full-f32 reference sanity check (bf16 matmul error must stay small).
    ref_f32 = gcn_forward_ref(a_hat, in_feat, weights, biases, match_bf16=False)
    assert jnp.allclose(out, ref_f32, atol=1e-1, rtol=1e-1), float(
        jnp.max(jnp.abs(out - ref_f32)))

    print("KERNEL_OK")
</pallas_src>

<mosaic_0001>
module attributes {stable_mosaic.version = 11 : i64} {
  func.func @fused_gcn_kernel(%arg0: i32, %arg1: memref<128x128xbf16, #tpu.memory_space<vmem>>, %arg2: memref<128x128xf32, #tpu.memory_space<vmem>>, %arg3: memref<5x128x128xbf16, #tpu.memory_space<vmem>>, %arg4: memref<5x1x128xf32, #tpu.memory_space<vmem>>, %arg5: memref<128x128xf32, #tpu.memory_space<vmem>>) attributes {dimension_semantics = [#tpu.dimension_semantics<arbitrary>], iteration_bounds = array<i64: 1>, scalar_prefetch = 0 : i64, scratch_operands = 0 : i64, tpu.core_type = #tpu.core_type<tc>, window_params = [{pipeline_mode = #tpu.pipeline_mode<synchronous>, transform_indices = @transform_0, window_bounds = array<i64: 128, 128>}, {pipeline_mode = #tpu.pipeline_mode<synchronous>, transform_indices = @transform_1, window_bounds = array<i64: 128, 128>}, {pipeline_mode = #tpu.pipeline_mode<synchronous>, transform_indices = @transform_2, window_bounds = array<i64: 5, 128, 128>}, {pipeline_mode = #tpu.pipeline_mode<synchronous>, transform_indices = @transform_3, window_bounds = array<i64: 5, 1, 128>}, {pipeline_mode = #tpu.pipeline_mode<synchronous>, transform_indices = @transform_4, window_bounds = array<i64: 128, 128>}]} {
    %c0 = arith.constant 0 : index
    %c0_0 = arith.constant 0 : index
    %0 = vector.load %arg1[%c0, %c0_0] : memref<128x128xbf16, #tpu.memory_space<vmem>>, vector<128x128xbf16>
    %c0_1 = arith.constant 0 : index
    %c0_2 = arith.constant 0 : index
    %1 = vector.load %arg2[%c0_1, %c0_2] : memref<128x128xf32, #tpu.memory_space<vmem>>, vector<128x128xf32>
    %2 = arith.truncf %1 : vector<128x128xf32> to vector<128x128xbf16>
    %c0_3 = arith.constant 0 : index
    %c0_4 = arith.constant 0 : index
    %c0_5 = arith.constant 0 : index
    %3 = vector.load %arg3[%c0_3, %c0_4, %c0_5] : memref<5x128x128xbf16, #tpu.memory_space<vmem>>, vector<1x128x128xbf16>
    %4 = vector.shape_cast %3 : vector<1x128x128xbf16> to vector<128x128xbf16>
    %cst = arith.constant dense<0.000000e+00> : vector<128x128xf32>
    %5 = tpu.matmul %2, %4, %cst {dimension_numbers = #tpu.dot_dimension_numbers<[1], [0], [0], [1], [0, 0, 1, 1], [], []>} : vector<128x128xbf16>, vector<128x128xbf16>, vector<128x128xf32> -> vector<128x128xf32>
    %6 = arith.truncf %5 : vector<128x128xf32> to vector<128x128xbf16>
    %cst_6 = arith.constant dense<0.000000e+00> : vector<128x128xf32>
    %7 = tpu.matmul %0, %6, %cst_6 {dimension_numbers = #tpu.dot_dimension_numbers<[1], [0], [0], [1], [0, 0, 1, 1], [], []>} : vector<128x128xbf16>, vector<128x128xbf16>, vector<128x128xf32> -> vector<128x128xf32>
    %c0_7 = arith.constant 0 : index
    %c0_8 = arith.constant 0 : index
    %c0_9 = arith.constant 0 : index
    %8 = vector.load %arg4[%c0_7, %c0_8, %c0_9] : memref<5x1x128xf32, #tpu.memory_space<vmem>>, vector<1x1x128xf32>
    %9 = vector.shape_cast %8 : vector<1x1x128xf32> to vector<1x128xf32>
    %10 = vector.broadcast %9 : vector<1x128xf32> to vector<128x128xf32>
    %11 = arith.addf %7, %10 : vector<128x128xf32>
    %12 = math.tanh %11 : vector<128x128xf32>
    %13 = arith.truncf %12 : vector<128x128xf32> to vector<128x128xbf16>
    %c1 = arith.constant 1 : index
    %c0_10 = arith.constant 0 : index
    %c0_11 = arith.constant 0 : index
    %14 = vector.load %arg3[%c1, %c0_10, %c0_11] : memref<5x128x128xbf16, #tpu.memory_space<vmem>>, vector<1x128x128xbf16>
    %15 = vector.shape_cast %14 : vector<1x128x128xbf16> to vector<128x128xbf16>
    %cst_12 = arith.constant dense<0.000000e+00> : vector<128x128xf32>
    %16 = tpu.matmul %13, %15, %cst_12 {dimension_numbers = #tpu.dot_dimension_numbers<[1], [0], [0], [1], [0, 0, 1, 1], [], []>} : vector<128x128xbf16>, vector<128x128xbf16>, vector<128x128xf32> -> vector<128x128xf32>
    %17 = arith.truncf %16 : vector<128x128xf32> to vector<128x128xbf16>
    %cst_13 = arith.constant dense<0.000000e+00> : vector<128x128xf32>
    %18 = tpu.matmul %0, %17, %cst_13 {dimension_numbers = #tpu.dot_dimension_numbers<[1], [0], [0], [1], [0, 0, 1, 1], [], []>} : vector<128x128xbf16>, vector<128x128xbf16>, vector<128x128xf32> -> vector<128x128xf32>
    %c1_14 = arith.constant 1 : index
    %c0_15 = arith.constant 0 : index
    %c0_16 = arith.constant 0 : index
    %19 = vector.load %arg4[%c1_14, %c0_15, %c0_16] : memref<5x1x128xf32, #tpu.memory_space<vmem>>, vector<1x1x128xf32>
    %20 = vector.shape_cast %19 : vector<1x1x128xf32> to vector<1x128xf32>
    %21 = vector.broadcast %20 : vector<1x128xf32> to vector<128x128xf32>
    %22 = arith.addf %18, %21 : vector<128x128xf32>
    %23 = math.tanh %22 : vector<128x128xf32>
    %24 = arith.truncf %23 : vector<128x128xf32> to vector<128x128xbf16>
    %c2 = arith.constant 2 : index
    %c0_17 = arith.constant 0 : index
    %c0_18 = arith.constant 0 : index
    %25 = vector.load %arg3[%c2, %c0_17, %c0_18] : memref<5x128x128xbf16, #tpu.memory_space<vmem>>, vector<1x128x128xbf16>
    %26 = vector.shape_cast %25 : vector<1x128x128xbf16> to vector<128x128xbf16>
    %cst_19 = arith.constant dense<0.000000e+00> : vector<128x128xf32>
    %27 = tpu.matmul %24, %26, %cst_19 {dimension_numbers = #tpu.dot_dimension_numbers<[1], [0], [0], [1], [0, 0, 1, 1], [], []>} : vector<128x128xbf16>, vector<128x128xbf16>, vector<128x128xf32> -> vector<128x128xf32>
    %28 = arith.truncf %27 : vector<128x128xf32> to vector<128x128xbf16>
    %cst_20 = arith.constant dense<0.000000e+00> : vector<128x128xf32>
    %29 = tpu.matmul %0, %28, %cst_20 {dimension_numbers = #tpu.dot_dimension_numbers<[1], [0], [0], [1], [0, 0, 1, 1], [], []>} : vector<128x128xbf16>, vector<128x128xbf16>, vector<128x128xf32> -> vector<128x128xf32>
    %c2_21 = arith.constant 2 : index
    %c0_22 = arith.constant 0 : index
    %c0_23 = arith.constant 0 : index
    %30 = vector.load %arg4[%c2_21, %c0_22, %c0_23] : memref<5x1x128xf32, #tpu.memory_space<vmem>>, vector<1x1x128xf32>
    %31 = vector.shape_cast %30 : vector<1x1x128xf32> to vector<1x128xf32>
    %32 = vector.broadcast %31 : vector<1x128xf32> to vector<128x128xf32>
    %33 = arith.addf %29, %32 : vector<128x128xf32>
    %34 = math.tanh %33 : vector<128x128xf32>
    %35 = arith.truncf %34 : vector<128x128xf32> to vector<128x128xbf16>
    %c3 = arith.constant 3 : index
    %c0_24 = arith.constant 0 : index
    %c0_25 = arith.constant 0 : index
    %36 = vector.load %arg3[%c3, %c0_24, %c0_25] : memref<5x128x128xbf16, #tpu.memory_space<vmem>>, vector<1x128x128xbf16>
    %37 = vector.shape_cast %36 : vector<1x128x128xbf16> to vector<128x128xbf16>
    %cst_26 = arith.constant dense<0.000000e+00> : vector<128x128xf32>
    %38 = tpu.matmul %35, %37, %cst_26 {dimension_numbers = #tpu.dot_dimension_numbers<[1], [0], [0], [1], [0, 0, 1, 1], [], []>} : vector<128x128xbf16>, vector<128x128xbf16>, vector<128x128xf32> -> vector<128x128xf32>
    %39 = arith.truncf %38 : vector<128x128xf32> to vector<128x128xbf16>
    %cst_27 = arith.constant dense<0.000000e+00> : vector<128x128xf32>
    %40 = tpu.matmul %0, %39, %cst_27 {dimension_numbers = #tpu.dot_dimension_numbers<[1], [0], [0], [1], [0, 0, 1, 1], [], []>} : vector<128x128xbf16>, vector<128x128xbf16>, vector<128x128xf32> -> vector<128x128xf32>
    %c3_28 = arith.constant 3 : index
    %c0_29 = arith.constant 0 : index
    %c0_30 = arith.constant 0 : index
    %41 = vector.load %arg4[%c3_28, %c0_29, %c0_30] : memref<5x1x128xf32, #tpu.memory_space<vmem>>, vector<1x1x128xf32>
    %42 = vector.shape_cast %41 : vector<1x1x128xf32> to vector<1x128xf32>
    %43 = vector.broadcast %42 : vector<1x128xf32> to vector<128x128xf32>
    %44 = arith.addf %40, %43 : vector<128x128xf32>
    %45 = math.tanh %44 : vector<128x128xf32>
    %46 = arith.truncf %45 : vector<128x128xf32> to vector<128x128xbf16>
    %c4 = arith.constant 4 : index
    %c0_31 = arith.constant 0 : index
    %c0_32 = arith.constant 0 : index
    %47 = vector.load %arg3[%c4, %c0_31, %c0_32] : memref<5x128x128xbf16, #tpu.memory_space<vmem>>, vector<1x128x128xbf16>
    %48 = vector.shape_cast %47 : vector<1x128x128xbf16> to vector<128x128xbf16>
    %cst_33 = arith.constant dense<0.000000e+00> : vector<128x128xf32>
    %49 = tpu.matmul %46, %48, %cst_33 {dimension_numbers = #tpu.dot_dimension_numbers<[1], [0], [0], [1], [0, 0, 1, 1], [], []>} : vector<128x128xbf16>, vector<128x128xbf16>, vector<128x128xf32> -> vector<128x128xf32>
    %50 = arith.truncf %49 : vector<128x128xf32> to vector<128x128xbf16>
    %cst_34 = arith.constant dense<0.000000e+00> : vector<128x128xf32>
    %51 = tpu.matmul %0, %50, %cst_34 {dimension_numbers = #tpu.dot_dimension_numbers<[1], [0], [0], [1], [0, 0, 1, 1], [], []>} : vector<128x128xbf16>, vector<128x128xbf16>, vector<128x128xf32> -> vector<128x128xf32>
    %c4_35 = arith.constant 4 : index
    %c0_36 = arith.constant 0 : index
    %c0_37 = arith.constant 0 : index
    %52 = vector.load %arg4[%c4_35, %c0_36, %c0_37] : memref<5x1x128xf32, #tpu.memory_space<vmem>>, vector<1x1x128xf32>
    %53 = vector.shape_cast %52 : vector<1x1x128xf32> to vector<1x128xf32>
    %54 = vector.broadcast %53 : vector<1x128xf32> to vector<128x128xf32>
    %55 = arith.addf %51, %54 : vector<128x128xf32>
    %c0_38 = arith.constant 0 : index
    %c0_39 = arith.constant 0 : index
    %56 = vector.load %arg5[%c0_38, %c0_39] : memref<128x128xf32, #tpu.memory_space<vmem>>, vector<128x128xf32>
    tpu.vector_store %arg5[%c0_38, %c0_39], %55 {strides = array<i32>} : memref<128x128xf32, #tpu.memory_space<vmem>>, vector<128x128xf32>,
    return
  }
  func.func @transform_0(%arg0: i32) -> (i32, i32) {
    %c0_i32 = arith.constant 0 : i32
    %c0_i32_0 = arith.constant 0 : i32
    %c0_i32_1 = arith.constant 0 : i32
    return %c0_i32, %c0_i32_0 : i32, i32
  }
  func.func @transform_1(%arg0: i32) -> (i32, i32) {
    %c0_i32 = arith.constant 0 : i32
    %c0_i32_0 = arith.constant 0 : i32
    %c0_i32_1 = arith.constant 0 : i32
    return %c0_i32, %c0_i32_0 : i32, i32
  }
  func.func @transform_2(%arg0: i32) -> (i32, i32, i32) {
    %c0_i32 = arith.constant 0 : i32
    %c0_i32_0 = arith.constant 0 : i32
    %c0_i32_1 = arith.constant 0 : i32
    %c0_i32_2 = arith.constant 0 : i32
    return %c0_i32, %c0_i32_0, %c0_i32_1 : i32, i32, i32
  }
  func.func @transform_3(%arg0: i32) -> (i32, i32, i32) {
    %c0_i32 = arith.constant 0 : i32
    %c0_i32_0 = arith.constant 0 : i32
    %c0_i32_1 = arith.constant 0 : i32
    %c0_i32_2 = arith.constant 0 : i32
    return %c0_i32, %c0_i32_0, %c0_i32_1 : i32, i32, i32
  }
  func.func @transform_4(%arg0: i32) -> (i32, i32) {
    %c0_i32 = arith.constant 0 : i32
    %c0_i32_0 = arith.constant 0 : i32
    %c0_i32_1 = arith.constant 0 : i32
    return %c0_i32, %c0_i32_0 : i32, i32
  }
}

</mosaic_0001>

<llo_original>
// kernel: tpu_custom_call.1
$region0: #{tpu_custom_call.1}
  #allocation0 [shape = 'u32[]', space=smem, size = 0x4, offset = 0x4, fixed_abs, tag = 'smem constant byte address 0x4 - core index']
  #allocation1 [shape = 'u32[144,128]{1,0:T(1,128)}', space=vmem, size = 0x12000, scoped, tag = 'internal scratch']
  %s0 = inlined_call_operand.hbm [shape: bf16[128,128], index: 0, kind: input, shape index: {}]
  %s1 = inlined_call_operand.hbm [shape: f32[128,128], index: 1, kind: input, shape index: {}]
  %s2 = inlined_call_operand.hbm [shape: bf16[5,128,128], index: 2, kind: input, shape index: {}]
  %s3 = inlined_call_operand.vmem [shape: f32[5,1,128], index: 3, kind: input, shape index: {}]
  %s4 = inlined_call_operand.hbm [shape: f32[128,128], index: 4, kind: output, shape index: {}]
  %s5 = sld [smem:[#allocation0]]
  $region38: #{tpu_custom_call.1} parent=0
    _
  %s7 = ssub.s32 1, %s5
  %s8 = scalar_select 0, %s7, %s5
  $region1: #{tpu_custom_call.1} parent=0
    #allocation2 [shape = 'u8[32768]{0}', space=vmem, size = 0x8000, scoped, tag = 'input window, operand 0, single buffered']
    #allocation3 [shape = 's32[1]{0}', space=sflag, size = 0x4, scoped, tag = 'scoped memory for tpu_custom_call.1']
    #allocation4 [shape = 's32[1]{0}', space=sflag, size = 0x4, scoped, tag = 'scoped memory for tpu_custom_call.1']
    #allocation5 [shape = 'u8[65536]{0}', space=vmem, size = 0x10000, scoped, tag = 'input window, operand 1, single buffered']
    #allocation6 [shape = 's32[1]{0}', space=sflag, size = 0x4, scoped, tag = 'scoped memory for tpu_custom_call.1']
    #allocation7 [shape = 'u8[163840]{0}', space=vmem, size = 0x28000, scoped, tag = 'input window, operand 2, single buffered']
    #allocation8 [shape = 'u8[65536]{0}', space=vmem, size = 0x10000, scoped, tag = 'output window, operand 0, single buffered']
    %9 = vsyncpa [#allocation3], 0
    %10 = vsyncpa [#allocation6], 0
    %11 = vsyncpa [#allocation4], 0
    // Predicated region
    $region2: #{tpu_custom_call.1} parent=1 // pred_check
      _
    $region3: #{tpu_custom_call.1} parent=1 // pred_check_branch
      %13 = sbr.rel (0) target = $region5
    $region4: #{tpu_custom_call.1} parent=1 // pred_region
      %s15 = ssub.s32 1024, 1024
      %16 = vsyncadd [#allocation3], %s15
      %s17 = sshll.u32 [#allocation2], 4
      %s18 = int_to_ptr.vmem [resolvable:$true] %s17
      %23 = dma.hbm_to_vmem [thread:$0]  %s0, 1024, %s18, [#allocation3], 64, 64, 4
    $region5: #{tpu_custom_call.1} parent=1 // pred_fallthru
      _
    // Predicated region
    $region6: #{tpu_custom_call.1} parent=1 // pred_check
      _
    $region7: #{tpu_custom_call.1} parent=1 // pred_check_branch
      %25 = sbr.rel (0) target = $region9
    $region8: #{tpu_custom_call.1} parent=1 // pred_region
      %s27 = ssub.s32 2048, 2048
      %28 = vsyncadd [#allocation6], %s27
      %s29 = sshll.u32 [#allocation5], 4
      %s30 = int_to_ptr.vmem [resolvable:$true] %s29
      %35 = dma.hbm_to_vmem [thread:$0]  %s1, 2048, %s30, [#allocation6], 128, 128, 8
    $region9: #{tpu_custom_call.1} parent=1 // pred_fallthru
      _
    // Predicated region
    $region10: #{tpu_custom_call.1} parent=1 // pred_check
      _
    $region11: #{tpu_custom_call.1} parent=1 // pred_check_branch
      %37 = sbr.rel (0) target = $region13
    $region12: #{tpu_custom_call.1} parent=1 // pred_region
      %s39 = ssub.s32 5120, 5120
      %40 = vsyncadd [#allocation6], %s39
      %s41 = sshll.u32 [#allocation7], 4
      %s42 = int_to_ptr.vmem [resolvable:$true] %s41
      %47 = dma.hbm_to_vmem [thread:$0]  %s2, 5120, %s42, [#allocation6], 64, 64, 4
    $region13: #{tpu_custom_call.1} parent=1 // pred_fallthru
      _
    // Predicated region
    $region14: #{tpu_custom_call.1} parent=1 // pred_check
      _
    $region15: #{tpu_custom_call.1} parent=1 // pred_check_branch
      %49 = sbr.rel (0) target = $region17
    $region16: #{tpu_custom_call.1} parent=1 // pred_region
      _
    $region17: #{tpu_custom_call.1} parent=1 // pred_fallthru
      _
    // Predicated region
    $region18: #{tpu_custom_call.1} parent=1 // pred_check
      _
    $region19: #{tpu_custom_call.1} parent=1 // pred_check_branch
      %51 = sbr.rel (0) target = $region21
    $region20: #{tpu_custom_call.1} parent=1 // pred_region
      %52 = dma.done [#allocation3], 1024
    $region21: #{tpu_custom_call.1} parent=1 // pred_fallthru
      _
    // Predicated region
    $region22: #{tpu_custom_call.1} parent=1 // pred_check
      _
    $region23: #{tpu_custom_call.1} parent=1 // pred_check_branch
      %54 = sbr.rel (0) target = $region25
    $region24: #{tpu_custom_call.1} parent=1 // pred_region
      %55 = dma.done [#allocation6], 2048
    $region25: #{tpu_custom_call.1} parent=1 // pred_fallthru
      _
    // Predicated region
    $region26: #{tpu_custom_call.1} parent=1 // pred_check
      _
    $region27: #{tpu_custom_call.1} parent=1 // pred_check_branch
      %57 = sbr.rel (0) target = $region29
    $region28: #{tpu_custom_call.1} parent=1 // pred_region
      %58 = dma.done [#allocation6], 5120
    $region29: #{tpu_custom_call.1} parent=1 // pred_fallthru
      _
    %v60 = vld [vmem:[#allocation2] sm:$0xf]
    %v61 = vld [vmem:[#allocation2 + $0x4] sm:$0xf]
    %v62 = vld [vmem:[#allocation2 + $0x8] sm:$0xf]
    %v63 = vld [vmem:[#allocation2 + $0xc] sm:$0xf]
    %v64 = vld [vmem:[#allocation2 + $0x10] sm:$0xf]
    %v65 = vld [vmem:[#allocation2 + $0x14] sm:$0xf]
    %v66 = vld [vmem:[#allocation2 + $0x18] sm:$0xf]
    %v67 = vld [vmem:[#allocation2 + $0x1c] sm:$0xf]
    %v68 = vld [vmem:[#allocation2 + $0x20] sm:$0xf]
    %v69 = vld [vmem:[#allocation2 + $0x24] sm:$0xf]
    %v70 = vld [vmem:[#allocation2 + $0x28] sm:$0xf]
    %v71 = vld [vmem:[#allocation2 + $0x2c] sm:$0xf]
    %v72 = vld [vmem:[#allocation2 + $0x30] sm:$0xf]
    %v73 = vld [vmem:[#allocation2 + $0x34] sm:$0xf]
    %v74 = vld [vmem:[#allocation2 + $0x38] sm:$0xf]
    %v75 = vld [vmem:[#allocation2 + $0x3c] sm:$0xf]
    %v76 = vld [vmem:[#allocation5] sm:$0xff]
    %v77 = vld [vmem:[#allocation5 + $0x8] sm:$0xff]
    %v78 = vld [vmem:[#allocation5 + $0x10] sm:$0xff]
    %v79 = vld [vmem:[#allocation5 + $0x18] sm:$0xff]
    %v80 = vld [vmem:[#allocation5 + $0x20] sm:$0xff]
    %v81 = vld [vmem:[#allocation5 + $0x28] sm:$0xff]
    %v82 = vld [vmem:[#allocation5 + $0x30] sm:$0xff]
    %v83 = vld [vmem:[#allocation5 + $0x38] sm:$0xff]
    %v84 = vld [vmem:[#allocation5 + $0x40] sm:$0xff]
    %v85 = vld [vmem:[#allocation5 + $0x48] sm:$0xff]
    %v86 = vld [vmem:[#allocation5 + $0x50] sm:$0xff]
    %v87 = vld [vmem:[#allocation5 + $0x58] sm:$0xff]
    %v88 = vld [vmem:[#allocation5 + $0x60] sm:$0xff]
    %v89 = vld [vmem:[#allocation5 + $0x68] sm:$0xff]
    %v90 = vld [vmem:[#allocation5 + $0x70] sm:$0xff]
    %v91 = vld [vmem:[#allocation5 + $0x78] sm:$0xff]
    %v92 = vpack.c.bf16 %v77, %v76
    %v93 = vpack.c.bf16 %v79, %v78
    %v94 = vpack.c.bf16 %v81, %v80
    %v95 = vpack.c.bf16 %v83, %v82
    %v96 = vpack.c.bf16 %v85, %v84
    %v97 = vpack.c.bf16 %v87, %v86
    %v98 = vpack.c.bf16 %v89, %v88
    %v99 = vpack.c.bf16 %v91, %v90
    %v100 = vld [vmem:[#allocation7] sm:$0xf]
    %v101 = vld [vmem:[#allocation7 + $0x4] sm:$0xf]
    %v102 = vld [vmem:[#allocation7 + $0x8] sm:$0xf]
    %v103 = vld [vmem:[#allocation7 + $0xc] sm:$0xf]
    %v104 = vld [vmem:[#allocation7 + $0x10] sm:$0xf]
    %v105 = vld [vmem:[#allocation7 + $0x14] sm:$0xf]
    %v106 = vld [vmem:[#allocation7 + $0x18] sm:$0xf]
    %v107 = vld [vmem:[#allocation7 + $0x1c] sm:$0xf]
    %v108 = vld [vmem:[#allocation7 + $0x20] sm:$0xf]
    %v109 = vld [vmem:[#allocation7 + $0x24] sm:$0xf]
    %v110 = vld [vmem:[#allocation7 + $0x28] sm:$0xf]
    %v111 = vld [vmem:[#allocation7 + $0x2c] sm:$0xf]
    %v112 = vld [vmem:[#allocation7 + $0x30] sm:$0xf]
    %v113 = vld [vmem:[#allocation7 + $0x34] sm:$0xf]
    %v114 = vld [vmem:[#allocation7 + $0x38] sm:$0xf]
    %v115 = vld [vmem:[#allocation7 + $0x3c] sm:$0xf]
    %v132 = vunpack.c.l.b16 %v100
    %v133 = vunpack.c.l.b16 %v101
    %v134 = vunpack.c.l.b16 %v102
    %v135 = vunpack.c.l.b16 %v103
    %v136 = vunpack.c.l.b16 %v104
    %v137 = vunpack.c.l.b16 %v105
    %v138 = vunpack.c.l.b16 %v106
    %v139 = vunpack.c.l.b16 %v107
    %v140 = vunpack.c.l.b16 %v108
    %v141 = vunpack.c.l.b16 %v109
    %v142 = vunpack.c.l.b16 %v110
    %v143 = vunpack.c.l.b16 %v111
    %v144 = vunpack.c.l.b16 %v112
    %v145 = vunpack.c.l.b16 %v113
    %v146 = vunpack.c.l.b16 %v114
    %v147 = vunpack.c.l.b16 %v115
    %v148 = vpack.c.b16 %v133, %v132
    %v149 = vpack.c.b16 %v135, %v134
    %v150 = vpack.c.b16 %v137, %v136
    %v151 = vpack.c.b16 %v139, %v138
    %v152 = vpack.c.b16 %v141, %v140
    %v153 = vpack.c.b16 %v143, %v142
    %v154 = vpack.c.b16 %v145, %v144
    %v155 = vpack.c.b16 %v147, %v146
    %164 = vmatprep.subr.bf16.mxu0 0
    %165 = vmatpush1.bf16.msra.mxu0 %v155
    %166 = vmatprep.subr.bf16.mxu0 0
    %167 = vmatpush1.bf16.msra.mxu0 %v154
    %168 = vmatprep.subr.bf16.mxu0 0
    %169 = vmatpush1.bf16.msra.mxu0 %v153
    %170 = vmatprep.subr.bf16.mxu0 0
    %171 = vmatpush1.bf16.msra.mxu0 %v152
    %172 = vmatprep.subr.bf16.mxu0 0
    %173 = vmatpush1.bf16.msra.mxu0 %v151
    %174 = vmatprep.subr.bf16.mxu0 0
    %175 = vmatpush1.bf16.msra.mxu0 %v150
    %176 = vmatprep.subr.bf16.mxu0 0
    %177 = vmatpush1.bf16.msra.mxu0 %v149
    %178 = vmatprep.subr.bf16.mxu0 0
    %179 = vmatpush1.bf16.msra.mxu0 %v148
    %180 = vmatprep.subr.bf16.mxu0 0
    %181 = vmatpush2.bf16.msra.mxu0 0
    %182 = vmatprep.subr.bf16.mxu0 0
    %183 = vmatpush2.bf16.msra.mxu0 0
    %184 = vmatprep.subr.bf16.mxu0 0
    %185 = vmatpush2.bf16.msra.mxu0 0
    %186 = vmatprep.subr.bf16.mxu0 0
    %187 = vmatpush2.bf16.msra.mxu0 0
    %188 = vmatprep.subr.bf16.mxu0 0
    %189 = vmatpush2.bf16.msra.mxu0 0
    %190 = vmatprep.subr.bf16.mxu0 0
    %191 = vmatpush2.bf16.msra.mxu0 0
    %192 = vmatprep.subr.bf16.mxu0 0
    %193 = vmatpush2.bf16.msra.mxu0 0
    %194 = vmatprep.subr.bf16.mxu0 0
    %195 = vmatpush2.bf16.msra.mxu0 0
    %196 = vmatprep.mubr.bf16.mxu0 0
    %197 = vmatmul.mubr.bf16.gmra.mxu0 %v92
    %v198 = vpop.f32.mrf.mxu0
    %v199 = vadd.f32 0.0, %v198
    %v200 = vpop.f32.mrf.mxu0
    %v201 = vpop.f32.mrf.mxu0
    %v202 = vadd.f32 0.0, %v201
    %v203 = vpop.f32.mrf.mxu0
    %204 = vmatprep.mubr.bf16.mxu0 0
    %205 = vmatmul.mubr.bf16.gmra.mxu0 %v93
    %v206 = vpop.f32.mrf.mxu0
    %v207 = vadd.f32 0.0, %v206
    %v208 = vpop.f32.mrf.mxu0
    %v209 = vpop.f32.mrf.mxu0
    %v210 = vadd.f32 0.0, %v209
    %v211 = vpop.f32.mrf.mxu0
    %212 = vmatprep.mubr.bf16.mxu0 0
    %213 = vmatmul.mubr.bf16.gmra.mxu0 %v94
    %v214 = vpop.f32.mrf.mxu0
    %v215 = vadd.f32 0.0, %v214
    %v216 = vpop.f32.mrf.mxu0
    %v217 = vpop.f32.mrf.mxu0
    %v218 = vadd.f32 0.0, %v217
    %v219 = vpop.f32.mrf.mxu0
    %220 = vmatprep.mubr.bf16.mxu0 0
    %221 = vmatmul.mubr.bf16.gmra.mxu0 %v95
    %v222 = vpop.f32.mrf.mxu0
    %v223 = vadd.f32 0.0, %v222
    %v224 = vpop.f32.mrf.mxu0
    %v225 = vpop.f32.mrf.mxu0
    %v226 = vadd.f32 0.0, %v225
    %v227 = vpop.f32.mrf.mxu0
    %228 = vmatprep.mubr.bf16.mxu0 0
    %229 = vmatmul.mubr.bf16.gmra.mxu0 %v96
    %v230 = vpop.f32.mrf.mxu0
    %v231 = vadd.f32 0.0, %v230
    %v232 = vpop.f32.mrf.mxu0
    %v233 = vpop.f32.mrf.mxu0
    %v234 = vadd.f32 0.0, %v233
    %v235 = vpop.f32.mrf.mxu0
    %236 = vmatprep.mubr.bf16.mxu0 0
    %237 = vmatmul.mubr.bf16.gmra.mxu0 %v97
    %v238 = vpop.f32.mrf.mxu0
    %v239 = vadd.f32 0.0, %v238
    %v240 = vpop.f32.mrf.mxu0
    %v241 = vpop.f32.mrf.mxu0
    %v242 = vadd.f32 0.0, %v241
    %v243 = vpop.f32.mrf.mxu0
    %244 = vmatprep.mubr.bf16.mxu0 0
    %245 = vmatmul.mubr.bf16.gmra.mxu0 %v98
    %v246 = vpop.f32.mrf.mxu0
    %v247 = vadd.f32 0.0, %v246
    %v248 = vpop.f32.mrf.mxu0
    %v249 = vpop.f32.mrf.mxu0
    %v250 = vadd.f32 0.0, %v249
    %v251 = vpop.f32.mrf.mxu0
    %252 = vmatprep.mubr.bf16.mxu0 0
    %253 = vmatmul.mubr.bf16.gmra.mxu0 %v99
    %v254 = vpop.f32.mrf.mxu0
    %v255 = vadd.f32 0.0, %v254
    %v256 = vpop.f32.mrf.mxu0
    %v257 = vpop.f32.mrf.mxu0
    %v258 = vadd.f32 0.0, %v257
    %v259 = vpop.f32.mrf.mxu0
    %260 = vdwg.mxu0
    %v261 = vpack.c.bf16 %v202, %v199
    %v262 = vpack.c.bf16 %v210, %v207
    %v263 = vpack.c.bf16 %v218, %v215
    %v264 = vpack.c.bf16 %v226, %v223
    %v265 = vpack.c.bf16 %v234, %v231
    %v266 = vpack.c.bf16 %v242, %v239
    %v267 = vpack.c.bf16 %v250, %v247
    %v268 = vpack.c.bf16 %v258, %v255
    %v269 = vld [vmem:[%s3] sm:$0x1]
    %v271 = vlaneseq
    %v272 = vshrl.u32 %v271, 7
    %v273 = vsub.s32 0, %v272
    %v274 = vrot.slane %v269, %v273
    %v292 = vunpack.c.l.b16 %v60
    %v293 = vunpack.c.l.b16 %v61
    %v294 = vunpack.c.l.b16 %v62
    %v295 = vunpack.c.l.b16 %v63
    %v296 = vunpack.c.l.b16 %v64
    %v297 = vunpack.c.l.b16 %v65
    %v298 = vunpack.c.l.b16 %v66
    %v299 = vunpack.c.l.b16 %v67
    %v300 = vunpack.c.l.b16 %v68
    %v301 = vunpack.c.l.b16 %v69
    %v302 = vunpack.c.l.b16 %v70
    %v303 = vunpack.c.l.b16 %v71
    %v304 = vunpack.c.l.b16 %v72
    %v305 = vunpack.c.l.b16 %v73
    %v306 = vunpack.c.l.b16 %v74
    %v307 = vunpack.c.l.b16 %v75
    %v308 = vpack.c.b16 %v293, %v292
    %v309 = vpack.c.b16 %v295, %v294
    %v310 = vpack.c.b16 %v297, %v296
    %v311 = vpack.c.b16 %v299, %v298
    %v312 = vpack.c.b16 %v301, %v300
    %v313 = vpack.c.b16 %v303, %v302
    %v314 = vpack.c.b16 %v305, %v304
    %v315 = vpack.c.b16 %v307, %v306
    %324 = vmatprep.subr.bf16.mxu0 0
    %325 = vmatpush1.bf16.msra.mxu0 %v268
    %326 = vmatprep.subr.bf16.mxu0 0
    %327 = vmatpush1.bf16.msra.mxu0 %v267
    %328 = vmatprep.subr.bf16.mxu0 0
    %329 = vmatpush1.bf16.msra.mxu0 %v266
    %330 = vmatprep.subr.bf16.mxu0 0
    %331 = vmatpush1.bf16.msra.mxu0 %v265
    %332 = vmatprep.subr.bf16.mxu0 0
    %333 = vmatpush1.bf16.msra.mxu0 %v264
    %334 = vmatprep.subr.bf16.mxu0 0
    %335 = vmatpush1.bf16.msra.mxu0 %v263
    %336 = vmatprep.subr.bf16.mxu0 0
    %337 = vmatpush1.bf16.msra.mxu0 %v262
    %338 = vmatprep.subr.bf16.mxu0 0
    %339 = vmatpush1.bf16.msra.mxu0 %v261
    %340 = vmatprep.subr.bf16.mxu0 0
    %341 = vmatpush2.bf16.msra.mxu0 0
    %342 = vmatprep.subr.bf16.mxu0 0
    %343 = vmatpush2.bf16.msra.mxu0 0
    %344 = vmatprep.subr.bf16.mxu0 0
    %345 = vmatpush2.bf16.msra.mxu0 0
    %346 = vmatprep.subr.bf16.mxu0 0
    %347 = vmatpush2.bf16.msra.mxu0 0
    %348 = vmatprep.subr.bf16.mxu0 0
    %349 = vmatpush2.bf16.msra.mxu0 0
    %350 = vmatprep.subr.bf16.mxu0 0
    %351 = vmatpush2.bf16.msra.mxu0 0
    %352 = vmatprep.subr.bf16.mxu0 0
    %353 = vmatpush2.bf16.msra.mxu0 0
    %354 = vmatprep.subr.bf16.mxu0 0
    %355 = vmatpush2.bf16.msra.mxu0 0
    %356 = vmatprep.mubr.bf16.mxu0 0
    %357 = vmatmul.mubr.bf16.gmra.mxu0 %v308
    %v358 = vpop.f32.mrf.mxu0
    %v359 = vadd.f32 %v274, %v358
    %v360 = vpop.f32.mrf.mxu0
    %v361 = vpop.f32.mrf.mxu0
    %v362 = vadd.f32 %v274, %v361
    %v363 = vpop.f32.mrf.mxu0
    %364 = vmatprep.mubr.bf16.mxu0 0
    %365 = vmatmul.mubr.bf16.gmra.mxu0 %v309
    %v366 = vpop.f32.mrf.mxu0
    %v367 = vadd.f32 %v274, %v366
    %v368 = vpop.f32.mrf.mxu0
    %v369 = vpop.f32.mrf.mxu0
    %v370 = vadd.f32 %v274, %v369
    %v371 = vpop.f32.mrf.mxu0
    %372 = vmatprep.mubr.bf16.mxu0 0
    %373 = vmatmul.mubr.bf16.gmra.mxu0 %v310
    %v374 = vpop.f32.mrf.mxu0
    %v375 = vadd.f32 %v274, %v374
    %v376 = vpop.f32.mrf.mxu0
    %v377 = vpop.f32.mrf.mxu0
    %v378 = vadd.f32 %v274, %v377
    %v379 = vpop.f32.mrf.mxu0
    %380 = vmatprep.mubr.bf16.mxu0 0
    %381 = vmatmul.mubr.bf16.gmra.mxu0 %v311
    %v382 = vpop.f32.mrf.mxu0
    %v383 = vadd.f32 %v274, %v382
    %v384 = vpop.f32.mrf.mxu0
    %v385 = vpop.f32.mrf.mxu0
    %v386 = vadd.f32 %v274, %v385
    %v387 = vpop.f32.mrf.mxu0
    %388 = vmatprep.mubr.bf16.mxu0 0
    %389 = vmatmul.mubr.bf16.gmra.mxu0 %v312
    %v390 = vpop.f32.mrf.mxu0
    %v391 = vadd.f32 %v274, %v390
    %v392 = vpop.f32.mrf.mxu0
    %v393 = vpop.f32.mrf.mxu0
    %v394 = vadd.f32 %v274, %v393
    %v395 = vpop.f32.mrf.mxu0
    %396 = vmatprep.mubr.bf16.mxu0 0
    %397 = vmatmul.mubr.bf16.gmra.mxu0 %v313
    %v398 = vpop.f32.mrf.mxu0
    %v399 = vadd.f32 %v274, %v398
    %v400 = vpop.f32.mrf.mxu0
    %v401 = vpop.f32.mrf.mxu0
    %v402 = vadd.f32 %v274, %v401
    %v403 = vpop.f32.mrf.mxu0
    %404 = vmatprep.mubr.bf16.mxu0 0
    %405 = vmatmul.mubr.bf16.gmra.mxu0 %v314
    %v406 = vpop.f32.mrf.mxu0
    %v407 = vadd.f32 %v274, %v406
    %v408 = vpop.f32.mrf.mxu0
    %v409 = vpop.f32.mrf.mxu0
    %v410 = vadd.f32 %v274, %v409
    %v411 = vpop.f32.mrf.mxu0
    %412 = vmatprep.mubr.bf16.mxu0 0
    %413 = vmatmul.mubr.bf16.gmra.mxu0 %v315
    %v414 = vpop.f32.mrf.mxu0
    %v415 = vadd.f32 %v274, %v414
    %v416 = vpop.f32.mrf.mxu0
    %v417 = vpop.f32.mrf.mxu0
    %v418 = vadd.f32 %v274, %v417
    %v419 = vpop.f32.mrf.mxu0
    %420 = vdwg.mxu0
    %v421 = vtanh.pop %v359
    %v422 = vtanh.pop %v362
    %v423 = vtanh.pop %v367
    %v424 = vtanh.pop %v370
    %v425 = vtanh.pop %v375
    %v426 = vtanh.pop %v378
    %v427 = vtanh.pop %v383
    %v428 = vtanh.pop %v386
    %v429 = vtanh.pop %v391
    %v430 = vtanh.pop %v394
    %v431 = vtanh.pop %v399
    %v432 = vtanh.pop %v402
    %v433 = vtanh.pop %v407
    %v434 = vtanh.pop %v410
    %v435 = vtanh.pop %v415
    %v436 = vtanh.pop %v418
    %v437 = vpack.c.bf16 %v422, %v421
    %v438 = vpack.c.bf16 %v424, %v423
    %v439 = vpack.c.bf16 %v426, %v425
    %v440 = vpack.c.bf16 %v428, %v427
    %v441 = vpack.c.bf16 %v430, %v429
    %v442 = vpack.c.bf16 %v432, %v431
    %v443 = vpack.c.bf16 %v434, %v433
    %v444 = vpack.c.bf16 %v436, %v435
    %s445 = scalar_lea.vmem [#allocation7], 64
    %v446 = vld [vmem:[%s445] sm:$0xf]
    %v447 = vld [vmem:[%s445 + $0x4] sm:$0xf]
    %v448 = vld [vmem:[%s445 + $0x8] sm:$0xf]
    %v449 = vld [vmem:[%s445 + $0xc] sm:$0xf]
    %v450 = vld [vmem:[%s445 + $0x10] sm:$0xf]
    %v451 = vld [vmem:[%s445 + $0x14] sm:$0xf]
    %v452 = vld [vmem:[%s445 + $0x18] sm:$0xf]
    %v453 = vld [vmem:[%s445 + $0x1c] sm:$0xf]
    %v454 = vld [vmem:[%s445 + $0x20] sm:$0xf]
    %v455 = vld [vmem:[%s445 + $0x24] sm:$0xf]
    %v456 = vld [vmem:[%s445 + $0x28] sm:$0xf]
    %v457 = vld [vmem:[%s445 + $0x2c] sm:$0xf]
    %v458 = vld [vmem:[%s445 + $0x30] sm:$0xf]
    %v459 = vld [vmem:[%s445 + $0x34] sm:$0xf]
    %v460 = vld [vmem:[%s445 + $0x38] sm:$0xf]
    %v461 = vld [vmem:[%s445 + $0x3c] sm:$0xf]
    %v478 = vunpack.c.l.b16 %v446
    %v479 = vunpack.c.l.b16 %v447
    %v480 = vunpack.c.l.b16 %v448
    %v481 = vunpack.c.l.b16 %v449
    %v482 = vunpack.c.l.b16 %v450
    %v483 = vunpack.c.l.b16 %v451
    %v484 = vunpack.c.l.b16 %v452
    %v485 = vunpack.c.l.b16 %v453
    %v486 = vunpack.c.l.b16 %v454
    %v487 = vunpack.c.l.b16 %v455
    %v488 = vunpack.c.l.b16 %v456
    %v489 = vunpack.c.l.b16 %v457
    %v490 = vunpack.c.l.b16 %v458
    %v491 = vunpack.c.l.b16 %v459
    %v492 = vunpack.c.l.b16 %v460
    %v493 = vunpack.c.l.b16 %v461
    %v494 = vpack.c.b16 %v479, %v478
    %v495 = vpack.c.b16 %v481, %v480
    %v496 = vpack.c.b16 %v483, %v482
    %v497 = vpack.c.b16 %v485, %v484
    %v498 = vpack.c.b16 %v487, %v486
    %v499 = vpack.c.b16 %v489, %v488
    %v500 = vpack.c.b16 %v491, %v490
    %v501 = vpack.c.b16 %v493, %v492
    %510 = vmatprep.subr.bf16.mxu0 0
    %511 = vmatpush1.bf16.msra.mxu0 %v501
    %512 = vmatprep.subr.bf16.mxu0 0
    %513 = vmatpush1.bf16.msra.mxu0 %v500
    %514 = vmatprep.subr.bf16.mxu0 0
    %515 = vmatpush1.bf16.msra.mxu0 %v499
    %516 = vmatprep.subr.bf16.mxu0 0
    %517 = vmatpush1.bf16.msra.mxu0 %v498
    %518 = vmatprep.subr.bf16.mxu0 0
    %519 = vmatpush1.bf16.msra.mxu0 %v497
    %520 = vmatprep.subr.bf16.mxu0 0
    %521 = vmatpush1.bf16.msra.mxu0 %v496
    %522 = vmatprep.subr.bf16.mxu0 0
    %523 = vmatpush1.bf16.msra.mxu0 %v495
    %524 = vmatprep.subr.bf16.mxu0 0
    %525 = vmatpush1.bf16.msra.mxu0 %v494
    %526 = vmatprep.subr.bf16.mxu0 0
    %527 = vmatpush2.bf16.msra.mxu0 0
    %528 = vmatprep.subr.bf16.mxu0 0
    %529 = vmatpush2.bf16.msra.mxu0 0
    %530 = vmatprep.subr.bf16.mxu0 0
    %531 = vmatpush2.bf16.msra.mxu0 0
    %532 = vmatprep.subr.bf16.mxu0 0
    %533 = vmatpush2.bf16.msra.mxu0 0
    %534 = vmatprep.subr.bf16.mxu0 0
    %535 = vmatpush2.bf16.msra.mxu0 0
    %536 = vmatprep.subr.bf16.mxu0 0
    %537 = vmatpush2.bf16.msra.mxu0 0
    %538 = vmatprep.subr.bf16.mxu0 0
    %539 = vmatpush2.bf16.msra.mxu0 0
    %540 = vmatprep.subr.bf16.mxu0 0
    %541 = vmatpush2.bf16.msra.mxu0 0
    %542 = vmatprep.mubr.bf16.mxu0 0
    %543 = vmatmul.mubr.bf16.gmra.mxu0 %v437
    %v544 = vpop.f32.mrf.mxu0
    %v545 = vadd.f32 0.0, %v544
    %v546 = vpop.f32.mrf.mxu0
    %v547 = vpop.f32.mrf.mxu0
    %v548 = vadd.f32 0.0, %v547
    %v549 = vpop.f32.mrf.mxu0
    %550 = vmatprep.mubr.bf16.mxu0 0
    %551 = vmatmul.mubr.bf16.gmra.mxu0 %v438
    %v552 = vpop.f32.mrf.mxu0
    %v553 = vadd.f32 0.0, %v552
    %v554 = vpop.f32.mrf.mxu0
    %v555 = vpop.f32.mrf.mxu0
    %v556 = vadd.f32 0.0, %v555
    %v557 = vpop.f32.mrf.mxu0
    %558 = vmatprep.mubr.bf16.mxu0 0
    %559 = vmatmul.mubr.bf16.gmra.mxu0 %v439
    %v560 = vpop.f32.mrf.mxu0
    %v561 = vadd.f32 0.0, %v560
    %v562 = vpop.f32.mrf.mxu0
    %v563 = vpop.f32.mrf.mxu0
    %v564 = vadd.f32 0.0, %v563
    %v565 = vpop.f32.mrf.mxu0
    %566 = vmatprep.mubr.bf16.mxu0 0
    %567 = vmatmul.mubr.bf16.gmra.mxu0 %v440
    %v568 = vpop.f32.mrf.mxu0
    %v569 = vadd.f32 0.0, %v568
    %v570 = vpop.f32.mrf.mxu0
    %v571 = vpop.f32.mrf.mxu0
    %v572 = vadd.f32 0.0, %v571
    %v573 = vpop.f32.mrf.mxu0
    %574 = vmatprep.mubr.bf16.mxu0 0
    %575 = vmatmul.mubr.bf16.gmra.mxu0 %v441
    %v576 = vpop.f32.mrf.mxu0
    %v577 = vadd.f32 0.0, %v576
    %v578 = vpop.f32.mrf.mxu0
    %v579 = vpop.f32.mrf.mxu0
    %v580 = vadd.f32 0.0, %v579
    %v581 = vpop.f32.mrf.mxu0
    %582 = vmatprep.mubr.bf16.mxu0 0
    %583 = vmatmul.mubr.bf16.gmra.mxu0 %v442
    %v584 = vpop.f32.mrf.mxu0
    %v585 = vadd.f32 0.0, %v584
    %v586 = vpop.f32.mrf.mxu0
    %v587 = vpop.f32.mrf.mxu0
    %v588 = vadd.f32 0.0, %v587
    %v589 = vpop.f32.mrf.mxu0
    %590 = vmatprep.mubr.bf16.mxu0 0
    %591 = vmatmul.mubr.bf16.gmra.mxu0 %v443
    %v592 = vpop.f32.mrf.mxu0
    %v593 = vadd.f32 0.0, %v592
    %v594 = vpop.f32.mrf.mxu0
    %v595 = vpop.f32.mrf.mxu0
    %v596 = vadd.f32 0.0, %v595
    %v597 = vpop.f32.mrf.mxu0
    %598 = vmatprep.mubr.bf16.mxu0 0
    %599 = vmatmul.mubr.bf16.gmra.mxu0 %v444
    %v600 = vpop.f32.mrf.mxu0
    %v601 = vadd.f32 0.0, %v600
    %v602 = vpop.f32.mrf.mxu0
    %v603 = vpop.f32.mrf.mxu0
    %v604 = vadd.f32 0.0, %v603
    %v605 = vpop.f32.mrf.mxu0
    %606 = vdwg.mxu0
    %v607 = vpack.c.bf16 %v548, %v545
    %v608 = vpack.c.bf16 %v556, %v553
    %v609 = vpack.c.bf16 %v564, %v561
    %v610 = vpack.c.bf16 %v572, %v569
    %v611 = vpack.c.bf16 %v580, %v577
    %v612 = vpack.c.bf16 %v588, %v585
    %v613 = vpack.c.bf16 %v596, %v593
    %v614 = vpack.c.bf16 %v604, %v601
    %s615 = scalar_lea.vmem %s3, 1
    %v616 = vld [vmem:[%s615] sm:$0x1]
    %v618 = vlaneseq
    %v619 = vshrl.u32 %v618, 7
    %v620 = vsub.s32 0, %v619
    %v621 = vrot.slane %v616, %v620
    %623 = vmatprep.subr.bf16.mxu0 0
    %624 = vmatpush1.bf16.msra.mxu0 %v614
    %625 = vmatprep.subr.bf16.mxu0 0
    %626 = vmatpush1.bf16.msra.mxu0 %v613
    %627 = vmatprep.subr.bf16.mxu0 0
    %628 = vmatpush1.bf16.msra.mxu0 %v612
    %629 = vmatprep.subr.bf16.mxu0 0
    %630 = vmatpush1.bf16.msra.mxu0 %v611
    %631 = vmatprep.subr.bf16.mxu0 0
    %632 = vmatpush1.bf16.msra.mxu0 %v610
    %633 = vmatprep.subr.bf16.mxu0 0
    %634 = vmatpush1.bf16.msra.mxu0 %v609
    %635 = vmatprep.subr.bf16.mxu0 0
    %636 = vmatpush1.bf16.msra.mxu0 %v608
    %637 = vmatprep.subr.bf16.mxu0 0
    %638 = vmatpush1.bf16.msra.mxu0 %v607
    %639 = vmatprep.subr.bf16.mxu0 0
    %640 = vmatpush2.bf16.msra.mxu0 0
    %641 = vmatprep.subr.bf16.mxu0 0
    %642 = vmatpush2.bf16.msra.mxu0 0
    %643 = vmatprep.subr.bf16.mxu0 0
    %644 = vmatpush2.bf16.msra.mxu0 0
    %645 = vmatprep.subr.bf16.mxu0 0
    %646 = vmatpush2.bf16.msra.mxu0 0
    %647 = vmatprep.subr.bf16.mxu0 0
    %648 = vmatpush2.bf16.msra.mxu0 0
    %649 = vmatprep.subr.bf16.mxu0 0
    %650 = vmatpush2.bf16.msra.mxu0 0
    %651 = vmatprep.subr.bf16.mxu0 0
    %652 = vmatpush2.bf16.msra.mxu0 0
    %653 = vmatprep.subr.bf16.mxu0 0
    %654 = vmatpush2.bf16.msra.mxu0 0
    %655 = vmatprep.mubr.bf16.mxu0 0
    %656 = vmatmul.mubr.bf16.gmra.mxu0 %v308
    %v657 = vpop.f32.mrf.mxu0
    %v658 = vadd.f32 %v621, %v657
    %v659 = vpop.f32.mrf.mxu0
    %v660 = vpop.f32.mrf.mxu0
    %v661 = vadd.f32 %v621, %v660
    %v662 = vpop.f32.mrf.mxu0
    %663 = vmatprep.mubr.bf16.mxu0 0
    %664 = vmatmul.mubr.bf16.gmra.mxu0 %v309
    %v665 = vpop.f32.mrf.mxu0
    %v666 = vadd.f32 %v621, %v665
    %v667 = vpop.f32.mrf.mxu0
    %v668 = vpop.f32.mrf.mxu0
    %v669 = vadd.f32 %v621, %v668
    %v670 = vpop.f32.mrf.mxu0
    %671 = vmatprep.mubr.bf16.mxu0 0
    %672 = vmatmul.mubr.bf16.gmra.mxu0 %v310
    %v673 = vpop.f32.mrf.mxu0
    %v674 = vadd.f32 %v621, %v673
    %v675 = vpop.f32.mrf.mxu0
    %v676 = vpop.f32.mrf.mxu0
    %v677 = vadd.f32 %v621, %v676
    %v678 = vpop.f32.mrf.mxu0
    %679 = vmatprep.mubr.bf16.mxu0 0
    %680 = vmatmul.mubr.bf16.gmra.mxu0 %v311
    %v681 = vpop.f32.mrf.mxu0
    %v682 = vadd.f32 %v621, %v681
    %v683 = vpop.f32.mrf.mxu0
    %v684 = vpop.f32.mrf.mxu0
    %v685 = vadd.f32 %v621, %v684
    %v686 = vpop.f32.mrf.mxu0
    %687 = vmatprep.mubr.bf16.mxu0 0
    %688 = vmatmul.mubr.bf16.gmra.mxu0 %v312
    %v689 = vpop.f32.mrf.mxu0
    %v690 = vadd.f32 %v621, %v689
    %v691 = vpop.f32.mrf.mxu0
    %v692 = vpop.f32.mrf.mxu0
    %v693 = vadd.f32 %v621, %v692
    %v694 = vpop.f32.mrf.mxu0
    %695 = vmatprep.mubr.bf16.mxu0 0
    %696 = vmatmul.mubr.bf16.gmra.mxu0 %v313
    %v697 = vpop.f32.mrf.mxu0
    %v698 = vadd.f32 %v621, %v697
    %v699 = vpop.f32.mrf.mxu0
    %v700 = vpop.f32.mrf.mxu0
    %v701 = vadd.f32 %v621, %v700
    %v702 = vpop.f32.mrf.mxu0
    %703 = vmatprep.mubr.bf16.mxu0 0
    %704 = vmatmul.mubr.bf16.gmra.mxu0 %v314
    %v705 = vpop.f32.mrf.mxu0
    %v706 = vadd.f32 %v621, %v705
    %v707 = vpop.f32.mrf.mxu0
    %v708 = vpop.f32.mrf.mxu0
    %v709 = vadd.f32 %v621, %v708
    %v710 = vpop.f32.mrf.mxu0
    %711 = vmatprep.mubr.bf16.mxu0 0
    %712 = vmatmul.mubr.bf16.gmra.mxu0 %v315
    %v713 = vpop.f32.mrf.mxu0
    %v714 = vadd.f32 %v621, %v713
    %v715 = vpop.f32.mrf.mxu0
    %v716 = vpop.f32.mrf.mxu0
    %v717 = vadd.f32 %v621, %v716
    %v718 = vpop.f32.mrf.mxu0
    %719 = vdwg.mxu0
    %v720 = vtanh.pop %v658
    %v721 = vtanh.pop %v661
    %v722 = vtanh.pop %v666
    %v723 = vtanh.pop %v669
    %v724 = vtanh.pop %v674
    %v725 = vtanh.pop %v677
    %v726 = vtanh.pop %v682
    %v727 = vtanh.pop %v685
    %v728 = vtanh.pop %v690
    %v729 = vtanh.pop %v693
    %v730 = vtanh.pop %v698
    %v731 = vtanh.pop %v701
    %v732 = vtanh.pop %v706
    %v733 = vtanh.pop %v709
    %v734 = vtanh.pop %v714
    %v735 = vtanh.pop %v717
    %v736 = vpack.c.bf16 %v721, %v720
    %v737 = vpack.c.bf16 %v723, %v722
    %v738 = vpack.c.bf16 %v725, %v724
    %v739 = vpack.c.bf16 %v727, %v726
    %v740 = vpack.c.bf16 %v729, %v728
    %v741 = vpack.c.bf16 %v731, %v730
    %v742 = vpack.c.bf16 %v733, %v732
    %v743 = vpack.c.bf16 %v735, %v734
    %s744 = scalar_lea.vmem [#allocation7], 128
    %v745 = vld [vmem:[%s744] sm:$0xf]
    %v746 = vld [vmem:[%s744 + $0x4] sm:$0xf]
    %v747 = vld [vmem:[%s744 + $0x8] sm:$0xf]
    %v748 = vld [vmem:[%s744 + $0xc] sm:$0xf]
    %v749 = vld [vmem:[%s744 + $0x10] sm:$0xf]
    %v750 = vld [vmem:[%s744 + $0x14] sm:$0xf]
    %v751 = vld [vmem:[%s744 + $0x18] sm:$0xf]
    %v752 = vld [vmem:[%s744 + $0x1c] sm:$0xf]
    %v753 = vld [vmem:[%s744 + $0x20] sm:$0xf]
    %v754 = vld [vmem:[%s744 + $0x24] sm:$0xf]
    %v755 = vld [vmem:[%s744 + $0x28] sm:$0xf]
    %v756 = vld [vmem:[%s744 + $0x2c] sm:$0xf]
    %v757 = vld [vmem:[%s744 + $0x30] sm:$0xf]
    %v758 = vld [vmem:[%s744 + $0x34] sm:$0xf]
    %v759 = vld [vmem:[%s744 + $0x38] sm:$0xf]
    %v760 = vld [vmem:[%s744 + $0x3c] sm:$0xf]
    %v777 = vunpack.c.l.b16 %v745
    %v778 = vunpack.c.l.b16 %v746
    %v779 = vunpack.c.l.b16 %v747
    %v780 = vunpack.c.l.b16 %v748
    %v781 = vunpack.c.l.b16 %v749
    %v782 = vunpack.c.l.b16 %v750
    %v783 = vunpack.c.l.b16 %v751
    %v784 = vunpack.c.l.b16 %v752
    %v785 = vunpack.c.l.b16 %v753
    %v786 = vunpack.c.l.b16 %v754
    %v787 = vunpack.c.l.b16 %v755
    %v788 = vunpack.c.l.b16 %v756
    %v789 = vunpack.c.l.b16 %v757
    %v790 = vunpack.c.l.b16 %v758
    %v791 = vunpack.c.l.b16 %v759
    %v792 = vunpack.c.l.b16 %v760
    %v793 = vpack.c.b16 %v778, %v777
    %v794 = vpack.c.b16 %v780, %v779
    %v795 = vpack.c.b16 %v782, %v781
    %v796 = vpack.c.b16 %v784, %v783
    %v797 = vpack.c.b16 %v786, %v785
    %v798 = vpack.c.b16 %v788, %v787
    %v799 = vpack.c.b16 %v790, %v789
    %v800 = vpack.c.b16 %v792, %v791
    %809 = vmatprep.subr.bf16.mxu0 0
    %810 = vmatpush1.bf16.msra.mxu0 %v800
    %811 = vmatprep.subr.bf16.mxu0 0
    %812 = vmatpush1.bf16.msra.mxu0 %v799
    %813 = vmatprep.subr.bf16.mxu0 0
    %814 = vmatpush1.bf16.msra.mxu0 %v798
    %815 = vmatprep.subr.bf16.mxu0 0
    %816 = vmatpush1.bf16.msra.mxu0 %v797
    %817 = vmatprep.subr.bf16.mxu0 0
    %818 = vmatpush1.bf16.msra.mxu0 %v796
    %819 = vmatprep.subr.bf16.mxu0 0
    %820 = vmatpush1.bf16.msra.mxu0 %v795
    %821 = vmatprep.subr.bf16.mxu0 0
    %822 = vmatpush1.bf16.msra.mxu0 %v794
    %823 = vmatprep.subr.bf16.mxu0 0
    %824 = vmatpush1.bf16.msra.mxu0 %v793
    %825 = vmatprep.subr.bf16.mxu0 0
    %826 = vmatpush2.bf16.msra.mxu0 0
    %827 = vmatprep.subr.bf16.mxu0 0
    %828 = vmatpush2.bf16.msra.mxu0 0
    %829 = vmatprep.subr.bf16.mxu0 0
    %830 = vmatpush2.bf16.msra.mxu0 0
    %831 = vmatprep.subr.bf16.mxu0 0
    %832 = vmatpush2.bf16.msra.mxu0 0
    %833 = vmatprep.subr.bf16.mxu0 0
    %834 = vmatpush2.bf16.msra.mxu0 0
    %835 = vmatprep.subr.bf16.mxu0 0
    %836 = vmatpush2.bf16.msra.mxu0 0
    %837 = vmatprep.subr.bf16.mxu0 0
    %838 = vmatpush2.bf16.msra.mxu0 0
    %839 = vmatprep.subr.bf16.mxu0 0
    %840 = vmatpush2.bf16.msra.mxu0 0
    %841 = vmatprep.mubr.bf16.mxu0 0
    %842 = vmatmul.mubr.bf16.gmra.mxu0 %v736
    %v843 = vpop.f32.mrf.mxu0
    %v844 = vadd.f32 0.0, %v843
    %v845 = vpop.f32.mrf.mxu0
    %v846 = vpop.f32.mrf.mxu0
    %v847 = vadd.f32 0.0, %v846
    %v848 = vpop.f32.mrf.mxu0
    %849 = vmatprep.mubr.bf16.mxu0 0
    %850 = vmatmul.mubr.bf16.gmra.mxu0 %v737
    %v851 = vpop.f32.mrf.mxu0
    %v852 = vadd.f32 0.0, %v851
    %v853 = vpop.f32.mrf.mxu0
    %v854 = vpop.f32.mrf.mxu0
    %v855 = vadd.f32 0.0, %v854
    %v856 = vpop.f32.mrf.mxu0
    %857 = vmatprep.mubr.bf16.mxu0 0
    %858 = vmatmul.mubr.bf16.gmra.mxu0 %v738
    %v859 = vpop.f32.mrf.mxu0
    %v860 = vadd.f32 0.0, %v859
    %v861 = vpop.f32.mrf.mxu0
    %v862 = vpop.f32.mrf.mxu0
    %v863 = vadd.f32 0.0, %v862
    %v864 = vpop.f32.mrf.mxu0
    %865 = vmatprep.mubr.bf16.mxu0 0
    %866 = vmatmul.mubr.bf16.gmra.mxu0 %v739
    %v867 = vpop.f32.mrf.mxu0
    %v868 = vadd.f32 0.0, %v867
    %v869 = vpop.f32.mrf.mxu0
    %v870 = vpop.f32.mrf.mxu0
    %v871 = vadd.f32 0.0, %v870
    %v872 = vpop.f32.mrf.mxu0
    %873 = vmatprep.mubr.bf16.mxu0 0
    %874 = vmatmul.mubr.bf16.gmra.mxu0 %v740
    %v875 = vpop.f32.mrf.mxu0
    %v876 = vadd.f32 0.0, %v875
    %v877 = vpop.f32.mrf.mxu0
    %v878 = vpop.f32.mrf.mxu0
    %v879 = vadd.f32 0.0, %v878
    %v880 = vpop.f32.mrf.mxu0
    %881 = vmatprep.mubr.bf16.mxu0 0
    %882 = vmatmul.mubr.bf16.gmra.mxu0 %v741
    %v883 = vpop.f32.mrf.mxu0
    %v884 = vadd.f32 0.0, %v883
    %v885 = vpop.f32.mrf.mxu0
    %v886 = vpop.f32.mrf.mxu0
    %v887 = vadd.f32 0.0, %v886
    %v888 = vpop.f32.mrf.mxu0
    %889 = vmatprep.mubr.bf16.mxu0 0
    %890 = vmatmul.mubr.bf16.gmra.mxu0 %v742
    %v891 = vpop.f32.mrf.mxu0
    %v892 = vadd.f32 0.0, %v891
    %v893 = vpop.f32.mrf.mxu0
    %v894 = vpop.f32.mrf.mxu0
    %v895 = vadd.f32 0.0, %v894
    %v896 = vpop.f32.mrf.mxu0
    %897 = vmatprep.mubr.bf16.mxu0 0
    %898 = vmatmul.mubr.bf16.gmra.mxu0 %v743
    %v899 = vpop.f32.mrf.mxu0
    %v900 = vadd.f32 0.0, %v899
    %v901 = vpop.f32.mrf.mxu0
    %v902 = vpop.f32.mrf.mxu0
    %v903 = vadd.f32 0.0, %v902
    %v904 = vpop.f32.mrf.mxu0
    %905 = vdwg.mxu0
    %v906 = vpack.c.bf16 %v847, %v844
    %v907 = vpack.c.bf16 %v855, %v852
    %v908 = vpack.c.bf16 %v863, %v860
    %v909 = vpack.c.bf16 %v871, %v868
    %v910 = vpack.c.bf16 %v879, %v876
    %v911 = vpack.c.bf16 %v887, %v884
    %v912 = vpack.c.bf16 %v895, %v892
    %v913 = vpack.c.bf16 %v903, %v900
    %s914 = scalar_lea.vmem %s3, 2
    %v915 = vld [vmem:[%s914] sm:$0x1]
    %v917 = vlaneseq
    %v918 = vshrl.u32 %v917, 7
    %v919 = vsub.s32 0, %v918
    %v920 = vrot.slane %v915, %v919
    %922 = vmatprep.subr.bf16.mxu0 0
    %923 = vmatpush1.bf16.msra.mxu0 %v913
    %924 = vmatprep.subr.bf16.mxu0 0
    %925 = vmatpush1.bf16.msra.mxu0 %v912
    %926 = vmatprep.subr.bf16.mxu0 0
    %927 = vmatpush1.bf16.msra.mxu0 %v911
    %928 = vmatprep.subr.bf16.mxu0 0
    %929 = vmatpush1.bf16.msra.mxu0 %v910
    %930 = vmatprep.subr.bf16.mxu0 0
    %931 = vmatpush1.bf16.msra.mxu0 %v909
    %932 = vmatprep.subr.bf16.mxu0 0
    %933 = vmatpush1.bf16.msra.mxu0 %v908
    %934 = vmatprep.subr.bf16.mxu0 0
    %935 = vmatpush1.bf16.msra.mxu0 %v907
    %936 = vmatprep.subr.bf16.mxu0 0
    %937 = vmatpush1.bf16.msra.mxu0 %v906
    %938 = vmatprep.subr.bf16.mxu0 0
    %939 = vmatpush2.bf16.msra.mxu0 0
    %940 = vmatprep.subr.bf16.mxu0 0
    %941 = vmatpush2.bf16.msra.mxu0 0
    %942 = vmatprep.subr.bf16.mxu0 0
    %943 = vmatpush2.bf16.msra.mxu0 0
    %944 = vmatprep.subr.bf16.mxu0 0
    %945 = vmatpush2.bf16.msra.mxu0 0
    %946 = vmatprep.subr.bf16.mxu0 0
    %947 = vmatpush2.bf16.msra.mxu0 0
    %948 = vmatprep.subr.bf16.mxu0 0
    %949 = vmatpush2.bf16.msra.mxu0 0
    %950 = vmatprep.subr.bf16.mxu0 0
    %951 = vmatpush2.bf16.msra.mxu0 0
    %952 = vmatprep.subr.bf16.mxu0 0
    %953 = vmatpush2.bf16.msra.mxu0 0
    %954 = vmatprep.mubr.bf16.mxu0 0
    %955 = vmatmul.mubr.bf16.gmra.mxu0 %v308
    %v956 = vpop.f32.mrf.mxu0
    %v957 = vadd.f32 %v920, %v956
    %v958 = vpop.f32.mrf.mxu0
    %v959 = vpop.f32.mrf.mxu0
    %v960 = vadd.f32 %v920, %v959
    %v961 = vpop.f32.mrf.mxu0
    %962 = vmatprep.mubr.bf16.mxu0 0
    %963 = vmatmul.mubr.bf16.gmra.mxu0 %v309
    %v964 = vpop.f32.mrf.mxu0
    %v965 = vadd.f32 %v920, %v964
    %v966 = vpop.f32.mrf.mxu0
    %v967 = vpop.f32.mrf.mxu0
    %v968 = vadd.f32 %v920, %v967
    %v969 = vpop.f32.mrf.mxu0
    %970 = vmatprep.mubr.bf16.mxu0 0
    %971 = vmatmul.mubr.bf16.gmra.mxu0 %v310
    %v972 = vpop.f32.mrf.mxu0
    %v973 = vadd.f32 %v920, %v972
    %v974 = vpop.f32.mrf.mxu0
    %v975 = vpop.f32.mrf.mxu0
    %v976 = vadd.f32 %v920, %v975
    %v977 = vpop.f32.mrf.mxu0
    %978 = vmatprep.mubr.bf16.mxu0 0
    %979 = vmatmul.mubr.bf16.gmra.mxu0 %v311
    %v980 = vpop.f32.mrf.mxu0
    %v981 = vadd.f32 %v920, %v980
    %v982 = vpop.f32.mrf.mxu0
    %v983 = vpop.f32.mrf.mxu0
    %v984 = vadd.f32 %v920, %v983
    %v985 = vpop.f32.mrf.mxu0
    %986 = vmatprep.mubr.bf16.mxu0 0
    %987 = vmatmul.mubr.bf16.gmra.mxu0 %v312
    %v988 = vpop.f32.mrf.mxu0
    %v989 = vadd.f32 %v920, %v988
    %v990 = vpop.f32.mrf.mxu0
    %v991 = vpop.f32.mrf.mxu0
    %v992 = vadd.f32 %v920, %v991
    %v993 = vpop.f32.mrf.mxu0
    %994 = vmatprep.mubr.bf16.mxu0 0
    %995 = vmatmul.mubr.bf16.gmra.mxu0 %v313
    %v996 = vpop.f32.mrf.mxu0
    %v997 = vadd.f32 %v920, %v996
    %v998 = vpop.f32.mrf.mxu0
    %v999 = vpop.f32.mrf.mxu0
    %v1000 = vadd.f32 %v920, %v999
    %v1001 = vpop.f32.mrf.mxu0
    %1002 = vmatprep.mubr.bf16.mxu0 0
    %1003 = vmatmul.mubr.bf16.gmra.mxu0 %v314
    %v1004 = vpop.f32.mrf.mxu0
    %v1005 = vadd.f32 %v920, %v1004
    %v1006 = vpop.f32.mrf.mxu0
    %v1007 = vpop.f32.mrf.mxu0
    %v1008 = vadd.f32 %v920, %v1007
    %v1009 = vpop.f32.mrf.mxu0
    %1010 = vmatprep.mubr.bf16.mxu0 0
    %1011 = vmatmul.mubr.bf16.gmra.mxu0 %v315
    %v1012 = vpop.f32.mrf.mxu0
    %v1013 = vadd.f32 %v920, %v1012
    %v1014 = vpop.f32.mrf.mxu0
    %v1015 = vpop.f32.mrf.mxu0
    %v1016 = vadd.f32 %v920, %v1015
    %v1017 = vpop.f32.mrf.mxu0
    %1018 = vdwg.mxu0
    %v1019 = vtanh.pop %v957
    %v1020 = vtanh.pop %v960
    %v1021 = vtanh.pop %v965
    %v1022 = vtanh.pop %v968
    %v1023 = vtanh.pop %v973
    %v1024 = vtanh.pop %v976
    %v1025 = vtanh.pop %v981
    %v1026 = vtanh.pop %v984
    %v1027 = vtanh.pop %v989
    %v1028 = vtanh.pop %v992
    %v1029 = vtanh.pop %v997
    %v1030 = vtanh.pop %v1000
    %v1031 = vtanh.pop %v1005
    %v1032 = vtanh.pop %v1008
    %v1033 = vtanh.pop %v1013
    %v1034 = vtanh.pop %v1016
    %v1035 = vpack.c.bf16 %v1020, %v1019
    %v1036 = vpack.c.bf16 %v1022, %v1021
    %v1037 = vpack.c.bf16 %v1024, %v1023
    %v1038 = vpack.c.bf16 %v1026, %v1025
    %v1039 = vpack.c.bf16 %v1028, %v1027
    %v1040 = vpack.c.bf16 %v1030, %v1029
    %v1041 = vpack.c.bf16 %v1032, %v1031
    %v1042 = vpack.c.bf16 %v1034, %v1033
    %s1043 = scalar_lea.vmem [#allocation7], 192
    %v1044 = vld [vmem:[%s1043] sm:$0xf]
    %v1045 = vld [vmem:[%s1043 + $0x4] sm:$0xf]
    %v1046 = vld [vmem:[%s1043 + $0x8] sm:$0xf]
    %v1047 = vld [vmem:[%s1043 + $0xc] sm:$0xf]
    %v1048 = vld [vmem:[%s1043 + $0x10] sm:$0xf]
    %v1049 = vld [vmem:[%s1043 + $0x14] sm:$0xf]
    %v1050 = vld [vmem:[%s1043 + $0x18] sm:$0xf]
    %v1051 = vld [vmem:[%s1043 + $0x1c] sm:$0xf]
    %v1052 = vld [vmem:[%s1043 + $0x20] sm:$0xf]
    %v1053 = vld [vmem:[%s1043 + $0x24] sm:$0xf]
    %v1054 = vld [vmem:[%s1043 + $0x28] sm:$0xf]
    %v1055 = vld [vmem:[%s1043 + $0x2c] sm:$0xf]
    %v1056 = vld [vmem:[%s1043 + $0x30] sm:$0xf]
    %v1057 = vld [vmem:[%s1043 + $0x34] sm:$0xf]
    %v1058 = vld [vmem:[%s1043 + $0x38] sm:$0xf]
    %v1059 = vld [vmem:[%s1043 + $0x3c] sm:$0xf]
    %v1076 = vunpack.c.l.b16 %v1044
    %v1077 = vunpack.c.l.b16 %v1045
    %v1078 = vunpack.c.l.b16 %v1046
    %v1079 = vunpack.c.l.b16 %v1047
    %v1080 = vunpack.c.l.b16 %v1048
    %v1081 = vunpack.c.l.b16 %v1049
    %v1082 = vunpack.c.l.b16 %v1050
    %v1083 = vunpack.c.l.b16 %v1051
    %v1084 = vunpack.c.l.b16 %v1052
    %v1085 = vunpack.c.l.b16 %v1053
    %v1086 = vunpack.c.l.b16 %v1054
    %v1087 = vunpack.c.l.b16 %v1055
    %v1088 = vunpack.c.l.b16 %v1056
    %v1089 = vunpack.c.l.b16 %v1057
    %v1090 = vunpack.c.l.b16 %v1058
    %v1091 = vunpack.c.l.b16 %v1059
    %v1092 = vpack.c.b16 %v1077, %v1076
    %v1093 = vpack.c.b16 %v1079, %v1078
    %v1094 = vpack.c.b16 %v1081, %v1080
    %v1095 = vpack.c.b16 %v1083, %v1082
    %v1096 = vpack.c.b16 %v1085, %v1084
    %v1097 = vpack.c.b16 %v1087, %v1086
    %v1098 = vpack.c.b16 %v1089, %v1088
    %v1099 = vpack.c.b16 %v1091, %v1090
    %1108 = vmatprep.subr.bf16.mxu0 0
    %1109 = vmatpush1.bf16.msra.mxu0 %v1099
    %1110 = vmatprep.subr.bf16.mxu0 0
    %1111 = vmatpush1.bf16.msra.mxu0 %v1098
    %1112 = vmatprep.subr.bf16.mxu0 0
    %1113 = vmatpush1.bf16.msra.mxu0 %v1097
    %1114 = vmatprep.subr.bf16.mxu0 0
    %1115 = vmatpush1.bf16.msra.mxu0 %v1096
    %1116 = vmatprep.subr.bf16.mxu0 0
    %1117 = vmatpush1.bf16.msra.mxu0 %v1095
    %1118 = vmatprep.subr.bf16.mxu0 0
    %1119 = vmatpush1.bf16.msra.mxu0 %v1094
    %1120 = vmatprep.subr.bf16.mxu0 0
    %1121 = vmatpush1.bf16.msra.mxu0 %v1093
    %1122 = vmatprep.subr.bf16.mxu0 0
    %1123 = vmatpush1.bf16.msra.mxu0 %v1092
    %1124 = vmatprep.subr.bf16.mxu0 0
    %1125 = vmatpush2.bf16.msra.mxu0 0
    %1126 = vmatprep.subr.bf16.mxu0 0
    %1127 = vmatpush2.bf16.msra.mxu0 0
    %1128 = vmatprep.subr.bf16.mxu0 0
    %1129 = vmatpush2.bf16.msra.mxu0 0
    %1130 = vmatprep.subr.bf16.mxu0 0
    %1131 = vmatpush2.bf16.msra.mxu0 0
    %1132 = vmatprep.subr.bf16.mxu0 0
    %1133 = vmatpush2.bf16.msra.mxu0 0
    %1134 = vmatprep.subr.bf16.mxu0 0
    %1135 = vmatpush2.bf16.msra.mxu0 0
    %1136 = vmatprep.subr.bf16.mxu0 0
    %1137 = vmatpush2.bf16.msra.mxu0 0
    %1138 = vmatprep.subr.bf16.mxu0 0
    %1139 = vmatpush2.bf16.msra.mxu0 0
    %1140 = vmatprep.mubr.bf16.mxu0 0
    %1141 = vmatmul.mubr.bf16.gmra.mxu0 %v1035
    %v1142 = vpop.f32.mrf.mxu0
    %v1143 = vadd.f32 0.0, %v1142
    %v1144 = vpop.f32.mrf.mxu0
    %v1145 = vpop.f32.mrf.mxu0
    %v1146 = vadd.f32 0.0, %v1145
    %v1147 = vpop.f32.mrf.mxu0
    %1148 = vmatprep.mubr.bf16.mxu0 0
    %1149 = vmatmul.mubr.bf16.gmra.mxu0 %v1036
    %v1150 = vpop.f32.mrf.mxu0
    %v1151 = vadd.f32 0.0, %v1150
    %v1152 = vpop.f32.mrf.mxu0
    %v1153 = vpop.f32.mrf.mxu0
    %v1154 = vadd.f32 0.0, %v1153
    %v1155 = vpop.f32.mrf.mxu0
    %1156 = vmatprep.mubr.bf16.mxu0 0
    %1157 = vmatmul.mubr.bf16.gmra.mxu0 %v1037
    %v1158 = vpop.f32.mrf.mxu0
    %v1159 = vadd.f32 0.0, %v1158
    %v1160 = vpop.f32.mrf.mxu0
    %v1161 = vpop.f32.mrf.mxu0
    %v1162 = vadd.f32 0.0, %v1161
    %v1163 = vpop.f32.mrf.mxu0
    %1164 = vmatprep.mubr.bf16.mxu0 0
    %1165 = vmatmul.mubr.bf16.gmra.mxu0 %v1038
    %v1166 = vpop.f32.mrf.mxu0
    %v1167 = vadd.f32 0.0, %v1166
    %v1168 = vpop.f32.mrf.mxu0
    %v1169 = vpop.f32.mrf.mxu0
    %v1170 = vadd.f32 0.0, %v1169
    %v1171 = vpop.f32.mrf.mxu0
    %1172 = vmatprep.mubr.bf16.mxu0 0
    %1173 = vmatmul.mubr.bf16.gmra.mxu0 %v1039
    %v1174 = vpop.f32.mrf.mxu0
    %v1175 = vadd.f32 0.0, %v1174
    %v1176 = vpop.f32.mrf.mxu0
    %v1177 = vpop.f32.mrf.mxu0
    %v1178 = vadd.f32 0.0, %v1177
    %v1179 = vpop.f32.mrf.mxu0
    %1180 = vmatprep.mubr.bf16.mxu0 0
    %1181 = vmatmul.mubr.bf16.gmra.mxu0 %v1040
    %v1182 = vpop.f32.mrf.mxu0
    %v1183 = vadd.f32 0.0, %v1182
    %v1184 = vpop.f32.mrf.mxu0
    %v1185 = vpop.f32.mrf.mxu0
    %v1186 = vadd.f32 0.0, %v1185
    %v1187 = vpop.f32.mrf.mxu0
    %1188 = vmatprep.mubr.bf16.mxu0 0
    %1189 = vmatmul.mubr.bf16.gmra.mxu0 %v1041
    %v1190 = vpop.f32.mrf.mxu0
    %v1191 = vadd.f32 0.0, %v1190
    %v1192 = vpop.f32.mrf.mxu0
    %v1193 = vpop.f32.mrf.mxu0
    %v1194 = vadd.f32 0.0, %v1193
    %v1195 = vpop.f32.mrf.mxu0
    %1196 = vmatprep.mubr.bf16.mxu0 0
    %1197 = vmatmul.mubr.bf16.gmra.mxu0 %v1042
    %v1198 = vpop.f32.mrf.mxu0
    %v1199 = vadd.f32 0.0, %v1198
    %v1200 = vpop.f32.mrf.mxu0
    %v1201 = vpop.f32.mrf.mxu0
    %v1202 = vadd.f32 0.0, %v1201
    %v1203 = vpop.f32.mrf.mxu0
    %1204 = vdwg.mxu0
    %v1205 = vpack.c.bf16 %v1146, %v1143
    %v1206 = vpack.c.bf16 %v1154, %v1151
    %v1207 = vpack.c.bf16 %v1162, %v1159
    %v1208 = vpack.c.bf16 %v1170, %v1167
    %v1209 = vpack.c.bf16 %v1178, %v1175
    %v1210 = vpack.c.bf16 %v1186, %v1183
    %v1211 = vpack.c.bf16 %v1194, %v1191
    %v1212 = vpack.c.bf16 %v1202, %v1199
    %s1213 = scalar_lea.vmem %s3, 3
    %v1214 = vld [vmem:[%s1213] sm:$0x1]
    %v1216 = vlaneseq
    %v1217 = vshrl.u32 %v1216, 7
    %v1218 = vsub.s32 0, %v1217
    %v1219 = vrot.slane %v1214, %v1218
    %1221 = vmatprep.subr.bf16.mxu0 0
    %1222 = vmatpush1.bf16.msra.mxu0 %v1212
    %1223 = vmatprep.subr.bf16.mxu0 0
    %1224 = vmatpush1.bf16.msra.mxu0 %v1211
    %1225 = vmatprep.subr.bf16.mxu0 0
    %1226 = vmatpush1.bf16.msra.mxu0 %v1210
    %1227 = vmatprep.subr.bf16.mxu0 0
    %1228 = vmatpush1.bf16.msra.mxu0 %v1209
    %1229 = vmatprep.subr.bf16.mxu0 0
    %1230 = vmatpush1.bf16.msra.mxu0 %v1208
    %1231 = vmatprep.subr.bf16.mxu0 0
    %1232 = vmatpush1.bf16.msra.mxu0 %v1207
    %1233 = vmatprep.subr.bf16.mxu0 0
    %1234 = vmatpush1.bf16.msra.mxu0 %v1206
    %1235 = vmatprep.subr.bf16.mxu0 0
    %1236 = vmatpush1.bf16.msra.mxu0 %v1205
    %1237 = vmatprep.subr.bf16.mxu0 0
    %1238 = vmatpush2.bf16.msra.mxu0 0
    %1239 = vmatprep.subr.bf16.mxu0 0
    %1240 = vmatpush2.bf16.msra.mxu0 0
    %1241 = vmatprep.subr.bf16.mxu0 0
    %1242 = vmatpush2.bf16.msra.mxu0 0
    %1243 = vmatprep.subr.bf16.mxu0 0
    %1244 = vmatpush2.bf16.msra.mxu0 0
    %1245 = vmatprep.subr.bf16.mxu0 0
    %1246 = vmatpush2.bf16.msra.mxu0 0
    %1247 = vmatprep.subr.bf16.mxu0 0
    %1248 = vmatpush2.bf16.msra.mxu0 0
    %1249 = vmatprep.subr.bf16.mxu0 0
    %1250 = vmatpush2.bf16.msra.mxu0 0
    %1251 = vmatprep.subr.bf16.mxu0 0
    %1252 = vmatpush2.bf16.msra.mxu0 0
    %1253 = vmatprep.mubr.bf16.mxu0 0
    %1254 = vmatmul.mubr.bf16.gmra.mxu0 %v308
    %v1255 = vpop.f32.mrf.mxu0
    %v1256 = vadd.f32 %v1219, %v1255
    %v1257 = vpop.f32.mrf.mxu0
    %v1258 = vpop.f32.mrf.mxu0
    %v1259 = vadd.f32 %v1219, %v1258
    %v1260 = vpop.f32.mrf.mxu0
    %1261 = vmatprep.mubr.bf16.mxu0 0
    %1262 = vmatmul.mubr.bf16.gmra.mxu0 %v309
    %v1263 = vpop.f32.mrf.mxu0
    %v1264 = vadd.f32 %v1219, %v1263
    %v1265 = vpop.f32.mrf.mxu0
    %v1266 = vpop.f32.mrf.mxu0
    %v1267 = vadd.f32 %v1219, %v1266
    %v1268 = vpop.f32.mrf.mxu0
    %1269 = vmatprep.mubr.bf16.mxu0 0
    %1270 = vmatmul.mubr.bf16.gmra.mxu0 %v310
    %v1271 = vpop.f32.mrf.mxu0
    %v1272 = vadd.f32 %v1219, %v1271
    %v1273 = vpop.f32.mrf.mxu0
    %v1274 = vpop.f32.mrf.mxu0
    %v1275 = vadd.f32 %v1219, %v1274
    %v1276 = vpop.f32.mrf.mxu0
    %1277 = vmatprep.mubr.bf16.mxu0 0
    %1278 = vmatmul.mubr.bf16.gmra.mxu0 %v311
    %v1279 = vpop.f32.mrf.mxu0
    %v1280 = vadd.f32 %v1219, %v1279
    %v1281 = vpop.f32.mrf.mxu0
    %v1282 = vpop.f32.mrf.mxu0
    %v1283 = vadd.f32 %v1219, %v1282
    %v1284 = vpop.f32.mrf.mxu0
    %1285 = vmatprep.mubr.bf16.mxu0 0
    %1286 = vmatmul.mubr.bf16.gmra.mxu0 %v312
    %v1287 = vpop.f32.mrf.mxu0
    %v1288 = vadd.f32 %v1219, %v1287
    %v1289 = vpop.f32.mrf.mxu0
    %v1290 = vpop.f32.mrf.mxu0
    %v1291 = vadd.f32 %v1219, %v1290
    %v1292 = vpop.f32.mrf.mxu0
    %1293 = vmatprep.mubr.bf16.mxu0 0
    %1294 = vmatmul.mubr.bf16.gmra.mxu0 %v313
    %v1295 = vpop.f32.mrf.mxu0
    %v1296 = vadd.f32 %v1219, %v1295
    %v1297 = vpop.f32.mrf.mxu0
    %v1298 = vpop.f32.mrf.mxu0
    %v1299 = vadd.f32 %v1219, %v1298
    %v1300 = vpop.f32.mrf.mxu0
    %1301 = vmatprep.mubr.bf16.mxu0 0
    %1302 = vmatmul.mubr.bf16.gmra.mxu0 %v314
    %v1303 = vpop.f32.mrf.mxu0
    %v1304 = vadd.f32 %v1219, %v1303
    %v1305 = vpop.f32.mrf.mxu0
    %v1306 = vpop.f32.mrf.mxu0
    %v1307 = vadd.f32 %v1219, %v1306
    %v1308 = vpop.f32.mrf.mxu0
    %1309 = vmatprep.mubr.bf16.mxu0 0
    %1310 = vmatmul.mubr.bf16.gmra.mxu0 %v315
    %v1311 = vpop.f32.mrf.mxu0
    %v1312 = vadd.f32 %v1219, %v1311
    %v1313 = vpop.f32.mrf.mxu0
    %v1314 = vpop.f32.mrf.mxu0
    %v1315 = vadd.f32 %v1219, %v1314
    %v1316 = vpop.f32.mrf.mxu0
    %1317 = vdwg.mxu0
    %v1318 = vtanh.pop %v1256
    %v1319 = vtanh.pop %v1259
    %v1320 = vtanh.pop %v1264
    %v1321 = vtanh.pop %v1267
    %v1322 = vtanh.pop %v1272
    %v1323 = vtanh.pop %v1275
    %v1324 = vtanh.pop %v1280
    %v1325 = vtanh.pop %v1283
    %v1326 = vtanh.pop %v1288
    %v1327 = vtanh.pop %v1291
    %v1328 = vtanh.pop %v1296
    %v1329 = vtanh.pop %v1299
    %v1330 = vtanh.pop %v1304
    %v1331 = vtanh.pop %v1307
    %v1332 = vtanh.pop %v1312
    %v1333 = vtanh.pop %v1315
    %v1334 = vpack.c.bf16 %v1319, %v1318
    %v1335 = vpack.c.bf16 %v1321, %v1320
    %v1336 = vpack.c.bf16 %v1323, %v1322
    %v1337 = vpack.c.bf16 %v1325, %v1324
    %v1338 = vpack.c.bf16 %v1327, %v1326
    %v1339 = vpack.c.bf16 %v1329, %v1328
    %v1340 = vpack.c.bf16 %v1331, %v1330
    %v1341 = vpack.c.bf16 %v1333, %v1332
    %s1342 = scalar_lea.vmem [#allocation7], 256
    %v1343 = vld [vmem:[%s1342] sm:$0xf]
    %v1344 = vld [vmem:[%s1342 + $0x4] sm:$0xf]
    %v1345 = vld [vmem:[%s1342 + $0x8] sm:$0xf]
    %v1346 = vld [vmem:[%s1342 + $0xc] sm:$0xf]
    %v1347 = vld [vmem:[%s1342 + $0x10] sm:$0xf]
    %v1348 = vld [vmem:[%s1342 + $0x14] sm:$0xf]
    %v1349 = vld [vmem:[%s1342 + $0x18] sm:$0xf]
    %v1350 = vld [vmem:[%s1342 + $0x1c] sm:$0xf]
    %v1351 = vld [vmem:[%s1342 + $0x20] sm:$0xf]
    %v1352 = vld [vmem:[%s1342 + $0x24] sm:$0xf]
    %v1353 = vld [vmem:[%s1342 + $0x28] sm:$0xf]
    %v1354 = vld [vmem:[%s1342 + $0x2c] sm:$0xf]
    %v1355 = vld [vmem:[%s1342 + $0x30] sm:$0xf]
    %v1356 = vld [vmem:[%s1342 + $0x34] sm:$0xf]
    %v1357 = vld [vmem:[%s1342 + $0x38] sm:$0xf]
    %v1358 = vld [vmem:[%s1342 + $0x3c] sm:$0xf]
    %v1375 = vunpack.c.l.b16 %v1343
    %v1376 = vunpack.c.l.b16 %v1344
    %v1377 = vunpack.c.l.b16 %v1345
    %v1378 = vunpack.c.l.b16 %v1346
    %v1379 = vunpack.c.l.b16 %v1347
    %v1380 = vunpack.c.l.b16 %v1348
    %v1381 = vunpack.c.l.b16 %v1349
    %v1382 = vunpack.c.l.b16 %v1350
    %v1383 = vunpack.c.l.b16 %v1351
    %v1384 = vunpack.c.l.b16 %v1352
    %v1385 = vunpack.c.l.b16 %v1353
    %v1386 = vunpack.c.l.b16 %v1354
    %v1387 = vunpack.c.l.b16 %v1355
    %v1388 = vunpack.c.l.b16 %v1356
    %v1389 = vunpack.c.l.b16 %v1357
    %v1390 = vunpack.c.l.b16 %v1358
    %v1391 = vpack.c.b16 %v1376, %v1375
    %v1392 = vpack.c.b16 %v1378, %v1377
    %v1393 = vpack.c.b16 %v1380, %v1379
    %v1394 = vpack.c.b16 %v1382, %v1381
    %v1395 = vpack.c.b16 %v1384, %v1383
    %v1396 = vpack.c.b16 %v1386, %v1385
    %v1397 = vpack.c.b16 %v1388, %v1387
    %v1398 = vpack.c.b16 %v1390, %v1389
    %1407 = vmatprep.subr.bf16.mxu0 0
    %1408 = vmatpush1.bf16.msra.mxu0 %v1398
    %1409 = vmatprep.subr.bf16.mxu0 0
    %1410 = vmatpush1.bf16.msra.mxu0 %v1397
    %1411 = vmatprep.subr.bf16.mxu0 0
    %1412 = vmatpush1.bf16.msra.mxu0 %v1396
    %1413 = vmatprep.subr.bf16.mxu0 0
    %1414 = vmatpush1.bf16.msra.mxu0 %v1395
    %1415 = vmatprep.subr.bf16.mxu0 0
    %1416 = vmatpush1.bf16.msra.mxu0 %v1394
    %1417 = vmatprep.subr.bf16.mxu0 0
    %1418 = vmatpush1.bf16.msra.mxu0 %v1393
    %1419 = vmatprep.subr.bf16.mxu0 0
    %1420 = vmatpush1.bf16.msra.mxu0 %v1392
    %1421 = vmatprep.subr.bf16.mxu0 0
    %1422 = vmatpush1.bf16.msra.mxu0 %v1391
    %1423 = vmatprep.subr.bf16.mxu0 0
    %1424 = vmatpush2.bf16.msra.mxu0 0
    %1425 = vmatprep.subr.bf16.mxu0 0
    %1426 = vmatpush2.bf16.msra.mxu0 0
    %1427 = vmatprep.subr.bf16.mxu0 0
    %1428 = vmatpush2.bf16.msra.mxu0 0
    %1429 = vmatprep.subr.bf16.mxu0 0
    %1430 = vmatpush2.bf16.msra.mxu0 0
    %1431 = vmatprep.subr.bf16.mxu0 0
    %1432 = vmatpush2.bf16.msra.mxu0 0
    %1433 = vmatprep.subr.bf16.mxu0 0
    %1434 = vmatpush2.bf16.msra.mxu0 0
    %1435 = vmatprep.subr.bf16.mxu0 0
    %1436 = vmatpush2.bf16.msra.mxu0 0
    %1437 = vmatprep.subr.bf16.mxu0 0
    %1438 = vmatpush2.bf16.msra.mxu0 0
    %1439 = vmatprep.mubr.bf16.mxu0 0
    %1440 = vmatmul.mubr.bf16.gmra.mxu0 %v1334
    %v1441 = vpop.f32.mrf.mxu0
    %v1442 = vadd.f32 0.0, %v1441
    %v1443 = vpop.f32.mrf.mxu0
    %v1444 = vpop.f32.mrf.mxu0
    %v1445 = vadd.f32 0.0, %v1444
    %v1446 = vpop.f32.mrf.mxu0
    %1447 = vmatprep.mubr.bf16.mxu0 0
    %1448 = vmatmul.mubr.bf16.gmra.mxu0 %v1335
    %v1449 = vpop.f32.mrf.mxu0
    %v1450 = vadd.f32 0.0, %v1449
    %v1451 = vpop.f32.mrf.mxu0
    %v1452 = vpop.f32.mrf.mxu0
    %v1453 = vadd.f32 0.0, %v1452
    %v1454 = vpop.f32.mrf.mxu0
    %1455 = vmatprep.mubr.bf16.mxu0 0
    %1456 = vmatmul.mubr.bf16.gmra.mxu0 %v1336
    %v1457 = vpop.f32.mrf.mxu0
    %v1458 = vadd.f32 0.0, %v1457
    %v1459 = vpop.f32.mrf.mxu0
    %v1460 = vpop.f32.mrf.mxu0
    %v1461 = vadd.f32 0.0, %v1460
    %v1462 = vpop.f32.mrf.mxu0
    %1463 = vmatprep.mubr.bf16.mxu0 0
    %1464 = vmatmul.mubr.bf16.gmra.mxu0 %v1337
    %v1465 = vpop.f32.mrf.mxu0
    %v1466 = vadd.f32 0.0, %v1465
    %v1467 = vpop.f32.mrf.mxu0
    %v1468 = vpop.f32.mrf.mxu0
    %v1469 = vadd.f32 0.0, %v1468
    %v1470 = vpop.f32.mrf.mxu0
    %1471 = vmatprep.mubr.bf16.mxu0 0
    %1472 = vmatmul.mubr.bf16.gmra.mxu0 %v1338
    %v1473 = vpop.f32.mrf.mxu0
    %v1474 = vadd.f32 0.0, %v1473
    %v1475 = vpop.f32.mrf.mxu0
    %v1476 = vpop.f32.mrf.mxu0
    %v1477 = vadd.f32 0.0, %v1476
    %v1478 = vpop.f32.mrf.mxu0
    %1479 = vmatprep.mubr.bf16.mxu0 0
    %1480 = vmatmul.mubr.bf16.gmra.mxu0 %v1339
    %v1481 = vpop.f32.mrf.mxu0
    %v1482 = vadd.f32 0.0, %v1481
    %v1483 = vpop.f32.mrf.mxu0
    %v1484 = vpop.f32.mrf.mxu0
    %v1485 = vadd.f32 0.0, %v1484
    %v1486 = vpop.f32.mrf.mxu0
    %1487 = vmatprep.mubr.bf16.mxu0 0
    %1488 = vmatmul.mubr.bf16.gmra.mxu0 %v1340
    %v1489 = vpop.f32.mrf.mxu0
    %v1490 = vadd.f32 0.0, %v1489
    %v1491 = vpop.f32.mrf.mxu0
    %v1492 = vpop.f32.mrf.mxu0
    %v1493 = vadd.f32 0.0, %v1492
    %v1494 = vpop.f32.mrf.mxu0
    %1495 = vmatprep.mubr.bf16.mxu0 0
    %1496 = vmatmul.mubr.bf16.gmra.mxu0 %v1341
    %v1497 = vpop.f32.mrf.mxu0
    %v1498 = vadd.f32 0.0, %v1497
    %v1499 = vpop.f32.mrf.mxu0
    %v1500 = vpop.f32.mrf.mxu0
    %v1501 = vadd.f32 0.0, %v1500
    %v1502 = vpop.f32.mrf.mxu0
    %1503 = vdwg.mxu0
    %v1504 = vpack.c.bf16 %v1445, %v1442
    %v1505 = vpack.c.bf16 %v1453, %v1450
    %v1506 = vpack.c.bf16 %v1461, %v1458
    %v1507 = vpack.c.bf16 %v1469, %v1466
    %v1508 = vpack.c.bf16 %v1477, %v1474
    %v1509 = vpack.c.bf16 %v1485, %v1482
    %v1510 = vpack.c.bf16 %v1493, %v1490
    %v1511 = vpack.c.bf16 %v1501, %v1498
    %s1512 = scalar_lea.vmem %s3, 4
    %v1513 = vld [vmem:[%s1512] sm:$0x1]
    %v1515 = vlaneseq
    %v1516 = vshrl.u32 %v1515, 7
    %v1517 = vsub.s32 0, %v1516
    %v1518 = vrot.slane %v1513, %v1517
    %1520 = vmatprep.subr.bf16.mxu0 0
    %1521 = vmatpush1.bf16.msra.mxu0 %v1511
    %1522 = vmatprep.subr.bf16.mxu0 0
    %1523 = vmatpush1.bf16.msra.mxu0 %v1510
    %1524 = vmatprep.subr.bf16.mxu0 0
    %1525 = vmatpush1.bf16.msra.mxu0 %v1509
    %1526 = vmatprep.subr.bf16.mxu0 0
    %1527 = vmatpush1.bf16.msra.mxu0 %v1508
    %1528 = vmatprep.subr.bf16.mxu0 0
    %1529 = vmatpush1.bf16.msra.mxu0 %v1507
    %1530 = vmatprep.subr.bf16.mxu0 0
    %1531 = vmatpush1.bf16.msra.mxu0 %v1506
    %1532 = vmatprep.subr.bf16.mxu0 0
    %1533 = vmatpush1.bf16.msra.mxu0 %v1505
    %1534 = vmatprep.subr.bf16.mxu0 0
    %1535 = vmatpush1.bf16.msra.mxu0 %v1504
    %1536 = vmatprep.subr.bf16.mxu0 0
    %1537 = vmatpush2.bf16.msra.mxu0 0
    %1538 = vmatprep.subr.bf16.mxu0 0
    %1539 = vmatpush2.bf16.msra.mxu0 0
    %1540 = vmatprep.subr.bf16.mxu0 0
    %1541 = vmatpush2.bf16.msra.mxu0 0
    %1542 = vmatprep.subr.bf16.mxu0 0
    %1543 = vmatpush2.bf16.msra.mxu0 0
    %1544 = vmatprep.subr.bf16.mxu0 0
    %1545 = vmatpush2.bf16.msra.mxu0 0
    %1546 = vmatprep.subr.bf16.mxu0 0
    %1547 = vmatpush2.bf16.msra.mxu0 0
    %1548 = vmatprep.subr.bf16.mxu0 0
    %1549 = vmatpush2.bf16.msra.mxu0 0
    %1550 = vmatprep.subr.bf16.mxu0 0
    %1551 = vmatpush2.bf16.msra.mxu0 0
    %1552 = vmatprep.mubr.bf16.mxu0 0
    %1553 = vmatmul.mubr.bf16.gmra.mxu0 %v308
    %v1554 = vpop.f32.mrf.mxu0
    %v1555 = vadd.f32 %v1518, %v1554
    %v1556 = vpop.f32.mrf.mxu0
    %v1557 = vpop.f32.mrf.mxu0
    %v1558 = vadd.f32 %v1518, %v1557
    %v1559 = vpop.f32.mrf.mxu0
    %1560 = vmatprep.mubr.bf16.mxu0 0
    %1561 = vmatmul.mubr.bf16.gmra.mxu0 %v309
    %v1562 = vpop.f32.mrf.mxu0
    %v1563 = vadd.f32 %v1518, %v1562
    %v1564 = vpop.f32.mrf.mxu0
    %v1565 = vpop.f32.mrf.mxu0
    %v1566 = vadd.f32 %v1518, %v1565
    %v1567 = vpop.f32.mrf.mxu0
    %1568 = vmatprep.mubr.bf16.mxu0 0
    %1569 = vmatmul.mubr.bf16.gmra.mxu0 %v310
    %v1570 = vpop.f32.mrf.mxu0
    %v1571 = vadd.f32 %v1518, %v1570
    %v1572 = vpop.f32.mrf.mxu0
    %v1573 = vpop.f32.mrf.mxu0
    %v1574 = vadd.f32 %v1518, %v1573
    %v1575 = vpop.f32.mrf.mxu0
    %1576 = vmatprep.mubr.bf16.mxu0 0
    %1577 = vmatmul.mubr.bf16.gmra.mxu0 %v311
    %v1578 = vpop.f32.mrf.mxu0
    %v1579 = vadd.f32 %v1518, %v1578
    %v1580 = vpop.f32.mrf.mxu0
    %v1581 = vpop.f32.mrf.mxu0
    %v1582 = vadd.f32 %v1518, %v1581
    %v1583 = vpop.f32.mrf.mxu0
    %1584 = vmatprep.mubr.bf16.mxu0 0
    %1585 = vmatmul.mubr.bf16.gmra.mxu0 %v312
    %v1586 = vpop.f32.mrf.mxu0
    %v1587 = vadd.f32 %v1518, %v1586
    %v1588 = vpop.f32.mrf.mxu0
    %v1589 = vpop.f32.mrf.mxu0
    %v1590 = vadd.f32 %v1518, %v1589
    %v1591 = vpop.f32.mrf.mxu0
    %1592 = vmatprep.mubr.bf16.mxu0 0
    %1593 = vmatmul.mubr.bf16.gmra.mxu0 %v313
    %v1594 = vpop.f32.mrf.mxu0
    %v1595 = vadd.f32 %v1518, %v1594
    %v1596 = vpop.f32.mrf.mxu0
    %v1597 = vpop.f32.mrf.mxu0
    %v1598 = vadd.f32 %v1518, %v1597
    %v1599 = vpop.f32.mrf.mxu0
    %1600 = vmatprep.mubr.bf16.mxu0 0
    %1601 = vmatmul.mubr.bf16.gmra.mxu0 %v314
    %v1602 = vpop.f32.mrf.mxu0
    %v1603 = vadd.f32 %v1518, %v1602
    %v1604 = vpop.f32.mrf.mxu0
    %v1605 = vpop.f32.mrf.mxu0
    %v1606 = vadd.f32 %v1518, %v1605
    %v1607 = vpop.f32.mrf.mxu0
    %1608 = vmatprep.mubr.bf16.mxu0 0
    %1609 = vmatmul.mubr.bf16.gmra.mxu0 %v315
    %v1610 = vpop.f32.mrf.mxu0
    %v1611 = vadd.f32 %v1518, %v1610
    %v1612 = vpop.f32.mrf.mxu0
    %v1613 = vpop.f32.mrf.mxu0
    %v1614 = vadd.f32 %v1518, %v1613
    %v1615 = vpop.f32.mrf.mxu0
    %1616 = vdwg.mxu0
    %1617 = vst [vmem:[#allocation8] sm:$0xff] %v1555
    %1618 = vst [vmem:[#allocation8 + $0x8] sm:$0xff] %v1558
    %1619 = vst [vmem:[#allocation8 + $0x10] sm:$0xff] %v1563
    %1620 = vst [vmem:[#allocation8 + $0x18] sm:$0xff] %v1566
    %1621 = vst [vmem:[#allocation8 + $0x20] sm:$0xff] %v1571
    %1622 = vst [vmem:[#allocation8 + $0x28] sm:$0xff] %v1574
    %1623 = vst [vmem:[#allocation8 + $0x30] sm:$0xff] %v1579
    %1624 = vst [vmem:[#allocation8 + $0x38] sm:$0xff] %v1582
    %1625 = vst [vmem:[#allocation8 + $0x40] sm:$0xff] %v1587
    %1626 = vst [vmem:[#allocation8 + $0x48] sm:$0xff] %v1590
    %1627 = vst [vmem:[#allocation8 + $0x50] sm:$0xff] %v1595
    %1628 = vst [vmem:[#allocation8 + $0x58] sm:$0xff] %v1598
    %1629 = vst [vmem:[#allocation8 + $0x60] sm:$0xff] %v1603
    %1630 = vst [vmem:[#allocation8 + $0x68] sm:$0xff] %v1606
    %1631 = vst [vmem:[#allocation8 + $0x70] sm:$0xff] %v1611
    %1632 = vst [vmem:[#allocation8 + $0x78] sm:$0xff] %v1614
    // Predicated region
    $region30: #{tpu_custom_call.1} parent=1 // pred_check
      _
    $region31: #{tpu_custom_call.1} parent=1 // pred_check_branch
      %1634 = sbr.rel (0) target = $region33
    $region32: #{tpu_custom_call.1} parent=1 // pred_region
      %s1636 = ssub.s32 2048, 2048
      %1637 = vsyncadd [#allocation4], %s1636
      %s1638 = sshll.u32 [#allocation8], 4
      %s1639 = int_to_ptr.vmem [resolvable:$true] %s1638
      %1644 = dma.vmem_to_hbm [thread:$0]  %s1639, 2048, %s4, [#allocation4], 128, 128, 8
    $region33: #{tpu_custom_call.1} parent=1 // pred_fallthru
      _
    // Predicated region
    $region34: #{tpu_custom_call.1} parent=1 // pred_check
      _
    $region35: #{tpu_custom_call.1} parent=1 // pred_check_branch
      %1646 = sbr.rel (0) target = $region37
    $region36: #{tpu_custom_call.1} parent=1 // pred_region
      %1647 = dma.done [#allocation4], 2048
    $region37: #{tpu_custom_call.1} parent=1 // pred_fallthru
      _
    %1648 = vsyncpa [#allocation3], 1
    %1649 = vsyncpa [#allocation6], 1
    %1650 = vsyncpa [#allocation4], 1

</llo_original>
